<compile_context>
chip_gen: v7x
topology: tpu7x:2x2x1
jax: 0.10.0
libtpu: 0.0.40
codegen_flags: <defaults>
</compile_context>

<pallas_src>
import functools

import jax
import jax.numpy as jnp
from jax import lax
from jax.experimental import pallas as pl
from jax.experimental.pallas import tpu as pltpu


def _layernorm(x, w, b, eps=1e-5):
    mu = jnp.mean(x, axis=-1, keepdims=True)
    var = jnp.mean((x - mu) ** 2, axis=-1, keepdims=True)
    return (x - mu) * lax.rsqrt(var + eps) * w + b


def encoder_layer_kernel(x_ref, fs_ref, fh_ref,
                         wqkv_ref, bqkv_ref, wo_ref, bo_ref,
                         w1_ref, b1_ref, w2_ref, b2_ref,
                         n1w_ref, n1b_ref, n2w_ref, n2b_ref,
                         o_ref,
                         qkv_ref, ctx_ref,
                         *, num_heads):
    bb, L, K = x_ref.shape
    M = bb * L
    dh = K // num_heads
    scale = 1.0 / float(dh) ** 0.5

    # Flatten the batch block into a single slab so every matmul has M rows.
    xs = x_ref[...].reshape(M, K)                    # (M, K) f32
    xb = xs.astype(jnp.bfloat16)

    # ---- fused QKV projection: one (M,K)x(K,3K) MXU matmul ----
    qkv_ref[...] = jnp.dot(xb, wqkv_ref[...],
                           preferred_element_type=jnp.float32) + bqkv_ref[...]

    # ---- per-(batch, head) attention core: rolled loop, flat vreg pressure ----
    def attn_body(b, carry):
        row = pl.multiple_of(b * L, L)
        for h in range(num_heads):                   # tiny static loop (static lane offsets)
            qh = qkv_ref[pl.ds(row, L), h * dh:(h + 1) * dh]
            kh = qkv_ref[pl.ds(row, L), K + h * dh:K + (h + 1) * dh]
            vh = qkv_ref[pl.ds(row, L), 2 * K + h * dh:2 * K + (h + 1) * dh]
            # scores: contract the dh dim of both operands (L is tiny, so the
            # implicit transpose of kh is cheap)
            s = lax.dot_general(qh.astype(jnp.bfloat16), kh.astype(jnp.bfloat16),
                                (((1,), (1,)), ((), ())),
                                preferred_element_type=jnp.float32) * scale
            s = s - jnp.max(s, axis=-1, keepdims=True)
            p = jnp.exp(s)
            p = p * pl.reciprocal(jnp.sum(p, axis=-1, keepdims=True), approx=True)
            ctx = jnp.dot(p.astype(jnp.bfloat16), vh.astype(jnp.bfloat16),
                          preferred_element_type=jnp.float32)         # (L, dh)
            ctx_ref[pl.ds(row, L), h * dh:(h + 1) * dh] = ctx
        return carry

    lax.fori_loop(0, bb, attn_body, 0)

    # ---- output projection on the full slab: one (M,K)x(K,K) matmul ----
    attn = jnp.dot(ctx_ref[...].astype(jnp.bfloat16), wo_ref[...],
                   preferred_element_type=jnp.float32) + bo_ref[...]

    # ---- FiLM scale/shift broadcast, built once per grid step ----
    fs = jnp.broadcast_to(fs_ref[...], (bb, L, K)).reshape(M, K)
    fh = jnp.broadcast_to(fh_ref[...], (bb, L, K)).reshape(M, K)

    # ---- residual + norm1 + FiLM (slab) ----
    x1 = _layernorm(xs + attn, n1w_ref[...], n1b_ref[...])
    x1 = fs * x1 + fh

    # ---- feed-forward (slab) ----
    h1 = jnp.dot(x1.astype(jnp.bfloat16), w1_ref[...],
                 preferred_element_type=jnp.float32) + b1_ref[...]
    h1 = jnp.maximum(h1, 0.0)                        # ReLU
    ff = jnp.dot(h1.astype(jnp.bfloat16), w2_ref[...],
                 preferred_element_type=jnp.float32) + b2_ref[...]

    # ---- residual + norm2 + FiLM ----
    x2 = _layernorm(x1 + ff, n2w_ref[...], n2b_ref[...])
    x2 = fs * x2 + fh

    o_ref[...] = x2.reshape(bb, L, K)


def _const_spec(a):
    # Constant weight/bias: same (whole-array) block every grid step.
    # NOTE: pipeline_mode=pl.Buffered(1) would single-buffer these and halve
    # their VMEM footprint; omitted for lowering robustness at these shapes.
    nd = a.ndim
    return pl.BlockSpec(a.shape, lambda i, _nd=nd: (0,) * _nd)


def _select_tiling(B, L, K, FF):
    """Generation-aware block_b / VMEM budget.

    v5e / v6e: single TensorCore, 128 MiB physical VMEM -> maximize block_b
               (fewest grid steps), generous vmem limit.
    v7x:       2 TensorCores, 64 MiB VMEM -> even >=2-step grid so both cores
               get work, tighter vmem limit.
    """
    kind = ""
    try:
        kind = jax.devices()[0].device_kind.lower()
    except Exception:
        pass
    is_v7 = "v7" in kind
    vmem_limit = (48 if is_v7 else 96) * 1024 * 1024

    # Rough footprint model: double-buffered x/out blocks + qkv/ctx scratch +
    # in-flight slab values (f32), plus double-buffered bf16 weights.
    weight_bytes = 2 * 2 * (3 * K * K + K * K + 2 * K * FF)
    act_per_batch = 4 * L * (16 * K + 2 * FF)
    budget = max(vmem_limit - weight_bytes - (8 << 20), act_per_batch)
    max_bb = max(1, budget // act_per_batch)

    best = 1
    for d in range(1, B + 1):
        if B % d or d > max_bb:
            continue
        steps = B // d
        if is_v7 and B >= 2 and (steps < 2 or steps % 2 != 0):
            continue
        best = d
    return best, vmem_limit


def transformer_encoder_layer(x, temb, params, num_heads, block_b=None):
    B, L, K = x.shape
    FF = params['l1_w'].shape[0]
    bf = jnp.bfloat16

    auto_bb, vmem_limit = _select_tiling(B, L, K, FF)
    if block_b is None:
        block_b = auto_bb
    assert B % block_b == 0

    # ---- wrapper-side (free) weight prep: transpose + bf16 cast ----
    wqkv = params['in_w'].T.astype(bf)               # (K, 3K), columns = [q | k | v]
    bqkv = params['in_b'].reshape(1, 3 * K)          # (1, 3K) f32
    wo = params['out_w'].T.astype(bf)                # (K, K)
    bo = params['out_b']                             # (1, K)
    w1 = params['l1_w'].T.astype(bf)                 # (K, FF)
    b1 = params['l1_b']                              # (1, FF)
    w2 = params['l2_w'].T.astype(bf)                 # (FF, K)
    b2 = params['l2_b']                              # (1, K)
    n1w, n1b = params['n1_w'], params['n1_b']
    n2w, n2b = params['n2_w'], params['n2_b']

    # ---- FiLM projection hoisted out of the kernel (plain XLA, f32) ----
    film = temb @ params['film_w'].T + params['film_b']      # (B, 2K)
    fs = film[:, 0:K].reshape(B, 1, K)
    fh = film[:, K:2 * K].reshape(B, 1, K)

    inputs = [x, fs, fh, wqkv, bqkv, wo, bo, w1, b1, w2, b2, n1w, n1b, n2w, n2b]

    in_specs = ([pl.BlockSpec((block_b, L, K), lambda i: (i, 0, 0)),
                 pl.BlockSpec((block_b, 1, K), lambda i: (i, 0, 0)),
                 pl.BlockSpec((block_b, 1, K), lambda i: (i, 0, 0))]
                + [_const_spec(a) for a in inputs[3:]])

    # Advisory cost hint so XLA schedules surrounding ops sensibly.
    flops = (2 * B * L * K * 3 * K          # fused QKV
             + 4 * B * L * L * K            # scores + ctx
             + 2 * B * L * K * K            # out projection
             + 4 * B * L * K * FF)          # FFN
    transcendentals = B * num_heads * L * L
    bytes_accessed = (4 * (2 * B * L * K + 2 * B * K)
                      + 2 * (3 * K * K + K * K + 2 * K * FF))

    kernel = functools.partial(encoder_layer_kernel, num_heads=num_heads)

    return pl.pallas_call(
        kernel,
        out_shape=jax.ShapeDtypeStruct((B, L, K), jnp.float32),
        grid_spec=pltpu.PrefetchScalarGridSpec(
            num_scalar_prefetch=0,
            grid=(B // block_b,),
            in_specs=in_specs,
            out_specs=pl.BlockSpec((block_b, L, K), lambda i: (i, 0, 0)),
            scratch_shapes=[pltpu.VMEM((block_b * L, 3 * K), jnp.float32),
                            pltpu.VMEM((block_b * L, K), jnp.float32)],
        ),
        compiler_params=pltpu.CompilerParams(
            dimension_semantics=("parallel",),
            vmem_limit_bytes=vmem_limit,
        ),
        cost_estimate=pl.CostEstimate(flops=flops,
                                      transcendentals=transcendentals,
                                      bytes_accessed=bytes_accessed),
    )(*inputs)


def _reference(x, temb, params, num_heads):
    """Pure-JAX reference mirroring the kernel math (bf16 matmul operands, f32 accum)."""
    B, L, K = x.shape
    dh = K // num_heads
    scale = 1.0 / float(dh) ** 0.5
    bf = jnp.bfloat16

    def mm(a, b):
        return jnp.dot(a.astype(bf), b.astype(bf), preferred_element_type=jnp.float32)

    in_w = params['in_w']
    in_b = params['in_b'].reshape(3 * K)
    x2d = x.reshape(B * L, K)
    q = (mm(x2d, in_w[0:K].T) + in_b[0:K]).reshape(B, L, num_heads, dh).transpose(0, 2, 1, 3)
    k = (mm(x2d, in_w[K:2 * K].T) + in_b[K:2 * K]).reshape(B, L, num_heads, dh).transpose(0, 2, 1, 3)
    v = (mm(x2d, in_w[2 * K:].T) + in_b[2 * K:]).reshape(B, L, num_heads, dh).transpose(0, 2, 1, 3)
    s = jnp.einsum('bhld,bhmd->bhlm', q.astype(bf), k.astype(bf),
                   preferred_element_type=jnp.float32) * scale
    p = jax.nn.softmax(s, axis=-1)
    ctx = jnp.einsum('bhlm,bhmd->bhld', p.astype(bf), v.astype(bf),
                     preferred_element_type=jnp.float32)
    ctx = ctx.transpose(0, 2, 1, 3).reshape(B * L, K)
    attn = (mm(ctx, params['out_w'].T) + params['out_b']).reshape(B, L, K)

    def ln(z, w, b):
        mu = z.mean(-1, keepdims=True)
        var = ((z - mu) ** 2).mean(-1, keepdims=True)
        return (z - mu) / jnp.sqrt(var + 1e-5) * w + b

    film = temb @ params['film_w'].T + params['film_b']
    f_scale = film[:, None, 0:K]
    f_shift = film[:, None, K:2 * K]

    x1 = ln(x + attn, params['n1_w'], params['n1_b'])
    x1 = f_scale * x1 + f_shift
    h1 = jnp.maximum(mm(x1.reshape(B * L, K), params['l1_w'].T) + params['l1_b'], 0.0)
    ff = (mm(h1, params['l2_w'].T) + params['l2_b']).reshape(B, L, K)
    x2 = ln(x1 + ff, params['n2_w'], params['n2_b'])
    x2 = f_scale * x2 + f_shift
    return x2


def make_params(key, d_model, num_heads, dim_feedforward, temb_dim):
    ks = jax.random.split(key, 8)
    sc = 0.05
    return {
        'in_w':   sc * jax.random.normal(ks[0], (3 * d_model, d_model), jnp.float32),
        'in_b':   sc * jax.random.normal(ks[1], (1, 3 * d_model), jnp.float32),
        'out_w':  sc * jax.random.normal(ks[2], (d_model, d_model), jnp.float32),
        'out_b':  sc * jax.random.normal(ks[3], (1, d_model), jnp.float32),
        'l1_w':   sc * jax.random.normal(ks[4], (dim_feedforward, d_model), jnp.float32),
        'l1_b':   sc * jax.random.normal(ks[5], (1, dim_feedforward), jnp.float32),
        'l2_w':   sc * jax.random.normal(ks[6], (d_model, dim_feedforward), jnp.float32),
        'l2_b':   sc * jax.random.normal(ks[7], (1, d_model), jnp.float32),
        'n1_w':   jnp.ones((1, d_model), jnp.float32),
        'n1_b':   jnp.zeros((1, d_model), jnp.float32),
        'n2_w':   jnp.ones((1, d_model), jnp.float32),
        'n2_b':   jnp.zeros((1, d_model), jnp.float32),
        'film_w': sc * jax.random.normal(jax.random.fold_in(key, 100),
                                         (2 * d_model, temb_dim), jnp.float32),
        'film_b': sc * jax.random.normal(jax.random.fold_in(key, 101),
                                         (1, 2 * d_model), jnp.float32),
    }


if __name__ == "__main__":
    B, L, K = 2, 8, 32
    num_heads = 4
    dim_feedforward = 64
    temb_dim = 16

    key = jax.random.PRNGKey(0)
    kx, kt, kp = jax.random.split(key, 3)
    x = jax.random.normal(kx, (B, L, K), jnp.float32)
    temb = jax.random.normal(kt, (B, temb_dim), jnp.float32)
    params = make_params(kp, K, num_heads, dim_feedforward, temb_dim)

    out = transformer_encoder_layer(x, temb, params, num_heads)
    out = jax.block_until_ready(out)

    ref = _reference(x, temb, params, num_heads)
    assert out.shape == (B, L, K)
    assert jnp.max(jnp.abs(out - ref)) < 5e-3, "mismatch vs reference"

    print("KERNEL_OK")
</pallas_src>

<mosaic_0001>
module attributes {stable_mosaic.version = 11 : i64} {
  func.func @encoder_layer_kernel(%arg0: i32, %arg1: memref<2x8x32xf32, #tpu.memory_space<vmem>>, %arg2: memref<2x1x32xf32, #tpu.memory_space<vmem>>, %arg3: memref<2x1x32xf32, #tpu.memory_space<vmem>>, %arg4: memref<32x96xbf16, #tpu.memory_space<vmem>>, %arg5: memref<1x96xf32, #tpu.memory_space<vmem>>, %arg6: memref<32x32xbf16, #tpu.memory_space<vmem>>, %arg7: memref<1x32xf32, #tpu.memory_space<vmem>>, %arg8: memref<32x64xbf16, #tpu.memory_space<vmem>>, %arg9: memref<1x64xf32, #tpu.memory_space<vmem>>, %arg10: memref<64x32xbf16, #tpu.memory_space<vmem>>, %arg11: memref<1x32xf32, #tpu.memory_space<vmem>>, %arg12: memref<1x32xf32, #tpu.memory_space<vmem>>, %arg13: memref<1x32xf32, #tpu.memory_space<vmem>>, %arg14: memref<1x32xf32, #tpu.memory_space<vmem>>, %arg15: memref<1x32xf32, #tpu.memory_space<vmem>>, %arg16: memref<2x8x32xf32, #tpu.memory_space<vmem>>, %arg17: memref<16x96xf32, #tpu.memory_space<vmem>>, %arg18: memref<16x32xf32, #tpu.memory_space<vmem>>) attributes {dimension_semantics = [#tpu.dimension_semantics<parallel>], iteration_bounds = array<i64: 1>, scalar_prefetch = 0 : i64, scratch_operands = 2 : i64, tpu.core_type = #tpu.core_type<tc>, window_params = [{transform_indices = @transform_0, window_bounds = array<i64: 2, 8, 32>}, {transform_indices = @transform_1, window_bounds = array<i64: 2, 1, 32>}, {transform_indices = @transform_2, window_bounds = array<i64: 2, 1, 32>}, {pipeline_mode = #tpu.pipeline_mode<synchronous>, transform_indices = @transform_3, window_bounds = array<i64: 32, 96>}, {pipeline_mode = #tpu.pipeline_mode<synchronous>, transform_indices = @transform_4, window_bounds = array<i64: 1, 96>}, {pipeline_mode = #tpu.pipeline_mode<synchronous>, transform_indices = @transform_5, window_bounds = array<i64: 32, 32>}, {pipeline_mode = #tpu.pipeline_mode<synchronous>, transform_indices = @transform_6, window_bounds = array<i64: 1, 32>}, {pipeline_mode = #tpu.pipeline_mode<synchronous>, transform_indices = @transform_7, window_bounds = array<i64: 32, 64>}, {pipeline_mode = #tpu.pipeline_mode<synchronous>, transform_indices = @transform_8, window_bounds = array<i64: 1, 64>}, {pipeline_mode = #tpu.pipeline_mode<synchronous>, transform_indices = @transform_9, window_bounds = array<i64: 64, 32>}, {pipeline_mode = #tpu.pipeline_mode<synchronous>, transform_indices = @transform_10, window_bounds = array<i64: 1, 32>}, {pipeline_mode = #tpu.pipeline_mode<synchronous>, transform_indices = @transform_11, window_bounds = array<i64: 1, 32>}, {pipeline_mode = #tpu.pipeline_mode<synchronous>, transform_indices = @transform_12, window_bounds = array<i64: 1, 32>}, {pipeline_mode = #tpu.pipeline_mode<synchronous>, transform_indices = @transform_13, window_bounds = array<i64: 1, 32>}, {pipeline_mode = #tpu.pipeline_mode<synchronous>, transform_indices = @transform_14, window_bounds = array<i64: 1, 32>}, {transform_indices = @transform_15, window_bounds = array<i64: 2, 8, 32>}]} {
    %c0 = arith.constant 0 : index
    %c0_0 = arith.constant 0 : index
    %c0_1 = arith.constant 0 : index
    %0 = vector.load %arg1[%c0, %c0_0, %c0_1] : memref<2x8x32xf32, #tpu.memory_space<vmem>>, vector<2x8x32xf32>
    %1 = vector.shape_cast %0 : vector<2x8x32xf32> to vector<16x32xf32>
    %2 = arith.truncf %1 : vector<16x32xf32> to vector<16x32xbf16>
    %c0_2 = arith.constant 0 : index
    %c0_3 = arith.constant 0 : index
    %3 = vector.load %arg4[%c0_2, %c0_3] : memref<32x96xbf16, #tpu.memory_space<vmem>>, vector<32x96xbf16>
    %cst = arith.constant dense<0.000000e+00> : vector<16x96xf32>
    %4 = tpu.matmul %2, %3, %cst {dimension_numbers = #tpu.dot_dimension_numbers<[1], [0], [0], [1], [0, 0, 1, 1], [], []>} : vector<16x32xbf16>, vector<32x96xbf16>, vector<16x96xf32> -> vector<16x96xf32>
    %c0_4 = arith.constant 0 : index
    %c0_5 = arith.constant 0 : index
    %5 = vector.load %arg5[%c0_4, %c0_5] : memref<1x96xf32, #tpu.memory_space<vmem>>, vector<1x96xf32>
    %6 = vector.broadcast %5 : vector<1x96xf32> to vector<16x96xf32>
    %7 = arith.addf %4, %6 : vector<16x96xf32>
    %c0_6 = arith.constant 0 : index
    %c0_7 = arith.constant 0 : index
    %8 = vector.load %arg17[%c0_6, %c0_7] : memref<16x96xf32, #tpu.memory_space<vmem>>, vector<16x96xf32>
    tpu.vector_store %arg17[%c0_6, %c0_7], %7 {strides = array<i32>} : memref<16x96xf32, #tpu.memory_space<vmem>>, vector<16x96xf32>,
    %c0_i32 = arith.constant 0 : i32
    %c2_i32 = arith.constant 2 : i32
    %9 = arith.addi %c0_i32, %c2_i32 : i32
    %c1_i32 = arith.constant 1 : i32
    scf.for %arg19 = %c0_i32 to %9 step %c1_i32  : i32 {
      %c8_i32 = arith.constant 8 : i32
      %95 = arith.muli %arg19, %c8_i32 : i32
      %96 = tpu.assume_multiple %95, 8 : i32
      %97 = arith.index_cast %96 : i32 to index
      %c0_54 = arith.constant 0 : index
      %98 = vector.load %arg17[%97, %c0_54] : memref<16x96xf32, #tpu.memory_space<vmem>>, vector<8x8xf32>
      %99 = arith.index_cast %96 : i32 to index
      %c32 = arith.constant 32 : index
      %100 = vector.load %arg17[%99, %c32] : memref<16x96xf32, #tpu.memory_space<vmem>>, vector<8x8xf32>
      %101 = arith.index_cast %96 : i32 to index
      %c64 = arith.constant 64 : index
      %102 = vector.load %arg17[%101, %c64] : memref<16x96xf32, #tpu.memory_space<vmem>>, vector<8x8xf32>
      %103 = arith.truncf %98 : vector<8x8xf32> to vector<8x8xbf16>
      %104 = arith.truncf %100 : vector<8x8xf32> to vector<8x8xbf16>
      %cst_55 = arith.constant dense<0.000000e+00> : vector<8x8xf32>
      %105 = tpu.matmul %103, %104, %cst_55 {dimension_numbers = #tpu.dot_dimension_numbers<[1], [1], [0], [0], [0, 0, 1, 0], [], []>} : vector<8x8xbf16>, vector<8x8xbf16>, vector<8x8xf32> -> vector<8x8xf32>
      %cst_56 = arith.constant 0.353553385 : f32
      %106 = vector.broadcast %cst_56 : f32 to vector<8x8xf32>
      %107 = arith.mulf %105, %106 : vector<8x8xf32>
      %cst_57 = arith.constant dense<0xFF800000> : vector<8xf32>
      %108 = vector.multi_reduction <maximumf>, %107, %cst_57 [1] : vector<8x8xf32> to vector<8xf32>
      %109 = vector.shape_cast %108 : vector<8xf32> to vector<8x1xf32>
      %110 = vector.broadcast %109 : vector<8x1xf32> to vector<8x8xf32>
      %111 = arith.subf %107, %110 : vector<8x8xf32>
      %112 = math.exp %111 : vector<8x8xf32>
      %cst_58 = arith.constant dense<0.000000e+00> : vector<8xf32>
      %113 = vector.multi_reduction <add>, %112, %cst_58 [1] : vector<8x8xf32> to vector<8xf32>
      %114 = vector.shape_cast %113 : vector<8xf32> to vector<8x1xf32>
      %115 = tpu.reciprocal %114 {approx = true} : vector<8x1xf32> -> vector<8x1xf32>
      %116 = vector.broadcast %115 : vector<8x1xf32> to vector<8x8xf32>
      %117 = arith.mulf %112, %116 : vector<8x8xf32>
      %118 = arith.truncf %117 : vector<8x8xf32> to vector<8x8xbf16>
      %119 = arith.truncf %102 : vector<8x8xf32> to vector<8x8xbf16>
      %cst_59 = arith.constant dense<0.000000e+00> : vector<8x8xf32>
      %120 = tpu.matmul %118, %119, %cst_59 {dimension_numbers = #tpu.dot_dimension_numbers<[1], [0], [0], [1], [0, 0, 1, 1], [], []>} : vector<8x8xbf16>, vector<8x8xbf16>, vector<8x8xf32> -> vector<8x8xf32>
      %121 = arith.index_cast %96 : i32 to index
      %c0_60 = arith.constant 0 : index
      %122 = vector.load %arg18[%121, %c0_60] : memref<16x32xf32, #tpu.memory_space<vmem>>, vector<8x8xf32>
      tpu.vector_store %arg18[%121, %c0_60], %120 {strides = array<i32>} : memref<16x32xf32, #tpu.memory_space<vmem>>, vector<8x8xf32>,
      %123 = arith.index_cast %96 : i32 to index
      %c8 = arith.constant 8 : index
      %124 = vector.load %arg17[%123, %c8] : memref<16x96xf32, #tpu.memory_space<vmem>>, vector<8x8xf32>
      %125 = arith.index_cast %96 : i32 to index
      %c40 = arith.constant 40 : index
      %126 = vector.load %arg17[%125, %c40] : memref<16x96xf32, #tpu.memory_space<vmem>>, vector<8x8xf32>
      %127 = arith.index_cast %96 : i32 to index
      %c72 = arith.constant 72 : index
      %128 = vector.load %arg17[%127, %c72] : memref<16x96xf32, #tpu.memory_space<vmem>>, vector<8x8xf32>
      %129 = arith.truncf %124 : vector<8x8xf32> to vector<8x8xbf16>
      %130 = arith.truncf %126 : vector<8x8xf32> to vector<8x8xbf16>
      %cst_61 = arith.constant dense<0.000000e+00> : vector<8x8xf32>
      %131 = tpu.matmul %129, %130, %cst_61 {dimension_numbers = #tpu.dot_dimension_numbers<[1], [1], [0], [0], [0, 0, 1, 0], [], []>} : vector<8x8xbf16>, vector<8x8xbf16>, vector<8x8xf32> -> vector<8x8xf32>
      %cst_62 = arith.constant 0.353553385 : f32
      %132 = vector.broadcast %cst_62 : f32 to vector<8x8xf32>
      %133 = arith.mulf %131, %132 : vector<8x8xf32>
      %cst_63 = arith.constant dense<0xFF800000> : vector<8xf32>
      %134 = vector.multi_reduction <maximumf>, %133, %cst_63 [1] : vector<8x8xf32> to vector<8xf32>
      %135 = vector.shape_cast %134 : vector<8xf32> to vector<8x1xf32>
      %136 = vector.broadcast %135 : vector<8x1xf32> to vector<8x8xf32>
      %137 = arith.subf %133, %136 : vector<8x8xf32>
      %138 = math.exp %137 : vector<8x8xf32>
      %cst_64 = arith.constant dense<0.000000e+00> : vector<8xf32>
      %139 = vector.multi_reduction <add>, %138, %cst_64 [1] : vector<8x8xf32> to vector<8xf32>
      %140 = vector.shape_cast %139 : vector<8xf32> to vector<8x1xf32>
      %141 = tpu.reciprocal %140 {approx = true} : vector<8x1xf32> -> vector<8x1xf32>
      %142 = vector.broadcast %141 : vector<8x1xf32> to vector<8x8xf32>
      %143 = arith.mulf %138, %142 : vector<8x8xf32>
      %144 = arith.truncf %143 : vector<8x8xf32> to vector<8x8xbf16>
      %145 = arith.truncf %128 : vector<8x8xf32> to vector<8x8xbf16>
      %cst_65 = arith.constant dense<0.000000e+00> : vector<8x8xf32>
      %146 = tpu.matmul %144, %145, %cst_65 {dimension_numbers = #tpu.dot_dimension_numbers<[1], [0], [0], [1], [0, 0, 1, 1], [], []>} : vector<8x8xbf16>, vector<8x8xbf16>, vector<8x8xf32> -> vector<8x8xf32>
      %147 = arith.index_cast %96 : i32 to index
      %c8_66 = arith.constant 8 : index
      %148 = vector.load %arg18[%147, %c8_66] : memref<16x32xf32, #tpu.memory_space<vmem>>, vector<8x8xf32>
      tpu.vector_store %arg18[%147, %c8_66], %146 {strides = array<i32>} : memref<16x32xf32, #tpu.memory_space<vmem>>, vector<8x8xf32>,
      %149 = arith.index_cast %96 : i32 to index
      %c16 = arith.constant 16 : index
      %150 = vector.load %arg17[%149, %c16] : memref<16x96xf32, #tpu.memory_space<vmem>>, vector<8x8xf32>
      %151 = arith.index_cast %96 : i32 to index
      %c48 = arith.constant 48 : index
      %152 = vector.load %arg17[%151, %c48] : memref<16x96xf32, #tpu.memory_space<vmem>>, vector<8x8xf32>
      %153 = arith.index_cast %96 : i32 to index
      %c80 = arith.constant 80 : index
      %154 = vector.load %arg17[%153, %c80] : memref<16x96xf32, #tpu.memory_space<vmem>>, vector<8x8xf32>
      %155 = arith.truncf %150 : vector<8x8xf32> to vector<8x8xbf16>
      %156 = arith.truncf %152 : vector<8x8xf32> to vector<8x8xbf16>
      %cst_67 = arith.constant dense<0.000000e+00> : vector<8x8xf32>
      %157 = tpu.matmul %155, %156, %cst_67 {dimension_numbers = #tpu.dot_dimension_numbers<[1], [1], [0], [0], [0, 0, 1, 0], [], []>} : vector<8x8xbf16>, vector<8x8xbf16>, vector<8x8xf32> -> vector<8x8xf32>
      %cst_68 = arith.constant 0.353553385 : f32
      %158 = vector.broadcast %cst_68 : f32 to vector<8x8xf32>
      %159 = arith.mulf %157, %158 : vector<8x8xf32>
      %cst_69 = arith.constant dense<0xFF800000> : vector<8xf32>
      %160 = vector.multi_reduction <maximumf>, %159, %cst_69 [1] : vector<8x8xf32> to vector<8xf32>
      %161 = vector.shape_cast %160 : vector<8xf32> to vector<8x1xf32>
      %162 = vector.broadcast %161 : vector<8x1xf32> to vector<8x8xf32>
      %163 = arith.subf %159, %162 : vector<8x8xf32>
      %164 = math.exp %163 : vector<8x8xf32>
      %cst_70 = arith.constant dense<0.000000e+00> : vector<8xf32>
      %165 = vector.multi_reduction <add>, %164, %cst_70 [1] : vector<8x8xf32> to vector<8xf32>
      %166 = vector.shape_cast %165 : vector<8xf32> to vector<8x1xf32>
      %167 = tpu.reciprocal %166 {approx = true} : vector<8x1xf32> -> vector<8x1xf32>
      %168 = vector.broadcast %167 : vector<8x1xf32> to vector<8x8xf32>
      %169 = arith.mulf %164, %168 : vector<8x8xf32>
      %170 = arith.truncf %169 : vector<8x8xf32> to vector<8x8xbf16>
      %171 = arith.truncf %154 : vector<8x8xf32> to vector<8x8xbf16>
      %cst_71 = arith.constant dense<0.000000e+00> : vector<8x8xf32>
      %172 = tpu.matmul %170, %171, %cst_71 {dimension_numbers = #tpu.dot_dimension_numbers<[1], [0], [0], [1], [0, 0, 1, 1], [], []>} : vector<8x8xbf16>, vector<8x8xbf16>, vector<8x8xf32> -> vector<8x8xf32>
      %173 = arith.index_cast %96 : i32 to index
      %c16_72 = arith.constant 16 : index
      %174 = vector.load %arg18[%173, %c16_72] : memref<16x32xf32, #tpu.memory_space<vmem>>, vector<8x8xf32>
      tpu.vector_store %arg18[%173, %c16_72], %172 {strides = array<i32>} : memref<16x32xf32, #tpu.memory_space<vmem>>, vector<8x8xf32>,
      %175 = arith.index_cast %96 : i32 to index
      %c24 = arith.constant 24 : index
      %176 = vector.load %arg17[%175, %c24] : memref<16x96xf32, #tpu.memory_space<vmem>>, vector<8x8xf32>
      %177 = arith.index_cast %96 : i32 to index
      %c56 = arith.constant 56 : index
      %178 = vector.load %arg17[%177, %c56] : memref<16x96xf32, #tpu.memory_space<vmem>>, vector<8x8xf32>
      %179 = arith.index_cast %96 : i32 to index
      %c88 = arith.constant 88 : index
      %180 = vector.load %arg17[%179, %c88] : memref<16x96xf32, #tpu.memory_space<vmem>>, vector<8x8xf32>
      %181 = arith.truncf %176 : vector<8x8xf32> to vector<8x8xbf16>
      %182 = arith.truncf %178 : vector<8x8xf32> to vector<8x8xbf16>
      %cst_73 = arith.constant dense<0.000000e+00> : vector<8x8xf32>
      %183 = tpu.matmul %181, %182, %cst_73 {dimension_numbers = #tpu.dot_dimension_numbers<[1], [1], [0], [0], [0, 0, 1, 0], [], []>} : vector<8x8xbf16>, vector<8x8xbf16>, vector<8x8xf32> -> vector<8x8xf32>
      %cst_74 = arith.constant 0.353553385 : f32
      %184 = vector.broadcast %cst_74 : f32 to vector<8x8xf32>
      %185 = arith.mulf %183, %184 : vector<8x8xf32>
      %cst_75 = arith.constant dense<0xFF800000> : vector<8xf32>
      %186 = vector.multi_reduction <maximumf>, %185, %cst_75 [1] : vector<8x8xf32> to vector<8xf32>
      %187 = vector.shape_cast %186 : vector<8xf32> to vector<8x1xf32>
      %188 = vector.broadcast %187 : vector<8x1xf32> to vector<8x8xf32>
      %189 = arith.subf %185, %188 : vector<8x8xf32>
      %190 = math.exp %189 : vector<8x8xf32>
      %cst_76 = arith.constant dense<0.000000e+00> : vector<8xf32>
      %191 = vector.multi_reduction <add>, %190, %cst_76 [1] : vector<8x8xf32> to vector<8xf32>
      %192 = vector.shape_cast %191 : vector<8xf32> to vector<8x1xf32>
      %193 = tpu.reciprocal %192 {approx = true} : vector<8x1xf32> -> vector<8x1xf32>
      %194 = vector.broadcast %193 : vector<8x1xf32> to vector<8x8xf32>
      %195 = arith.mulf %190, %194 : vector<8x8xf32>
      %196 = arith.truncf %195 : vector<8x8xf32> to vector<8x8xbf16>
      %197 = arith.truncf %180 : vector<8x8xf32> to vector<8x8xbf16>
      %cst_77 = arith.constant dense<0.000000e+00> : vector<8x8xf32>
      %198 = tpu.matmul %196, %197, %cst_77 {dimension_numbers = #tpu.dot_dimension_numbers<[1], [0], [0], [1], [0, 0, 1, 1], [], []>} : vector<8x8xbf16>, vector<8x8xbf16>, vector<8x8xf32> -> vector<8x8xf32>
      %199 = arith.index_cast %96 : i32 to index
      %c24_78 = arith.constant 24 : index
      %200 = vector.load %arg18[%199, %c24_78] : memref<16x32xf32, #tpu.memory_space<vmem>>, vector<8x8xf32>
      tpu.vector_store %arg18[%199, %c24_78], %198 {strides = array<i32>} : memref<16x32xf32, #tpu.memory_space<vmem>>, vector<8x8xf32>,
    }
    %c2_i32_8 = arith.constant 2 : i32
    %c0_9 = arith.constant 0 : index
    %c0_10 = arith.constant 0 : index
    %10 = vector.load %arg18[%c0_9, %c0_10] : memref<16x32xf32, #tpu.memory_space<vmem>>, vector<16x32xf32>
    %11 = arith.truncf %10 : vector<16x32xf32> to vector<16x32xbf16>
    %c0_11 = arith.constant 0 : index
    %c0_12 = arith.constant 0 : index
    %12 = vector.load %arg6[%c0_11, %c0_12] : memref<32x32xbf16, #tpu.memory_space<vmem>>, vector<32x32xbf16>
    %cst_13 = arith.constant dense<0.000000e+00> : vector<16x32xf32>
    %13 = tpu.matmul %11, %12, %cst_13 {dimension_numbers = #tpu.dot_dimension_numbers<[1], [0], [0], [1], [0, 0, 1, 1], [], []>} : vector<16x32xbf16>, vector<32x32xbf16>, vector<16x32xf32> -> vector<16x32xf32>
    %c0_14 = arith.constant 0 : index
    %c0_15 = arith.constant 0 : index
    %14 = vector.load %arg7[%c0_14, %c0_15] : memref<1x32xf32, #tpu.memory_space<vmem>>, vector<1x32xf32>
    %15 = vector.broadcast %14 : vector<1x32xf32> to vector<16x32xf32>
    %16 = arith.addf %13, %15 : vector<16x32xf32>
    %c0_16 = arith.constant 0 : index
    %c0_17 = arith.constant 0 : index
    %c0_18 = arith.constant 0 : index
    %17 = vector.load %arg2[%c0_16, %c0_17, %c0_18] : memref<2x1x32xf32, #tpu.memory_space<vmem>>, vector<2x1x32xf32>
    %18 = vector.shape_cast %17 : vector<2x1x32xf32> to vector<2x1x32xf32>
    %19 = vector.broadcast %18 : vector<2x1x32xf32> to vector<2x8x32xf32>
    %20 = vector.shape_cast %19 : vector<2x8x32xf32> to vector<16x32xf32>
    %c0_19 = arith.constant 0 : index
    %c0_20 = arith.constant 0 : index
    %c0_21 = arith.constant 0 : index
    %21 = vector.load %arg3[%c0_19, %c0_20, %c0_21] : memref<2x1x32xf32, #tpu.memory_space<vmem>>, vector<2x1x32xf32>
    %22 = vector.shape_cast %21 : vector<2x1x32xf32> to vector<2x1x32xf32>
    %23 = vector.broadcast %22 : vector<2x1x32xf32> to vector<2x8x32xf32>
    %24 = vector.shape_cast %23 : vector<2x8x32xf32> to vector<16x32xf32>
    %25 = arith.addf %1, %16 : vector<16x32xf32>
    %c0_22 = arith.constant 0 : index
    %c0_23 = arith.constant 0 : index
    %26 = vector.load %arg12[%c0_22, %c0_23] : memref<1x32xf32, #tpu.memory_space<vmem>>, vector<1x32xf32>
    %c0_24 = arith.constant 0 : index
    %c0_25 = arith.constant 0 : index
    %27 = vector.load %arg13[%c0_24, %c0_25] : memref<1x32xf32, #tpu.memory_space<vmem>>, vector<1x32xf32>
    %cst_26 = arith.constant dense<0.000000e+00> : vector<16xf32>
    %28 = vector.multi_reduction <add>, %25, %cst_26 [1] : vector<16x32xf32> to vector<16xf32>
    %29 = vector.shape_cast %28 : vector<16xf32> to vector<16x1xf32>
    %cst_27 = arith.constant 3.200000e+01 : f32
    %30 = vector.broadcast %cst_27 : f32 to vector<16x1xf32>
    %31 = arith.divf %29, %30 : vector<16x1xf32>
    %32 = vector.broadcast %31 : vector<16x1xf32> to vector<16x32xf32>
    %33 = arith.subf %25, %32 : vector<16x32xf32>
    %34 = arith.mulf %33, %33 : vector<16x32xf32>
    %cst_28 = arith.constant dense<0.000000e+00> : vector<16xf32>
    %35 = vector.multi_reduction <add>, %34, %cst_28 [1] : vector<16x32xf32> to vector<16xf32>
    %36 = vector.shape_cast %35 : vector<16xf32> to vector<16x1xf32>
    %cst_29 = arith.constant 3.200000e+01 : f32
    %37 = vector.broadcast %cst_29 : f32 to vector<16x1xf32>
    %38 = arith.divf %36, %37 : vector<16x1xf32>
    %39 = vector.broadcast %31 : vector<16x1xf32> to vector<16x32xf32>
    %40 = arith.subf %25, %39 : vector<16x32xf32>
    %cst_30 = arith.constant 9.99999974E-6 : f32
    %41 = vector.broadcast %cst_30 : f32 to vector<16x1xf32>
    %42 = arith.addf %38, %41 : vector<16x1xf32>
    %43 = math.rsqrt %42 : vector<16x1xf32>
    %44 = vector.broadcast %43 : vector<16x1xf32> to vector<16x32xf32>
    %45 = arith.mulf %40, %44 : vector<16x32xf32>
    %46 = vector.broadcast %26 : vector<1x32xf32> to vector<16x32xf32>
    %47 = arith.mulf %45, %46 : vector<16x32xf32>
    %48 = vector.broadcast %27 : vector<1x32xf32> to vector<16x32xf32>
    %49 = arith.addf %47, %48 : vector<16x32xf32>
    %50 = arith.mulf %20, %49 : vector<16x32xf32>
    %51 = arith.addf %50, %24 : vector<16x32xf32>
    %52 = arith.truncf %51 : vector<16x32xf32> to vector<16x32xbf16>
    %c0_31 = arith.constant 0 : index
    %c0_32 = arith.constant 0 : index
    %53 = vector.load %arg8[%c0_31, %c0_32] : memref<32x64xbf16, #tpu.memory_space<vmem>>, vector<32x64xbf16>
    %cst_33 = arith.constant dense<0.000000e+00> : vector<16x64xf32>
    %54 = tpu.matmul %52, %53, %cst_33 {dimension_numbers = #tpu.dot_dimension_numbers<[1], [0], [0], [1], [0, 0, 1, 1], [], []>} : vector<16x32xbf16>, vector<32x64xbf16>, vector<16x64xf32> -> vector<16x64xf32>
    %c0_34 = arith.constant 0 : index
    %c0_35 = arith.constant 0 : index
    %55 = vector.load %arg9[%c0_34, %c0_35] : memref<1x64xf32, #tpu.memory_space<vmem>>, vector<1x64xf32>
    %56 = vector.broadcast %55 : vector<1x64xf32> to vector<16x64xf32>
    %57 = arith.addf %54, %56 : vector<16x64xf32>
    %cst_36 = arith.constant 0.000000e+00 : f32
    %58 = vector.broadcast %cst_36 : f32 to vector<16x64xf32>
    %59 = arith.maximumf %57, %58 : vector<16x64xf32>
    %60 = arith.truncf %59 : vector<16x64xf32> to vector<16x64xbf16>
    %c0_37 = arith.constant 0 : index
    %c0_38 = arith.constant 0 : index
    %61 = vector.load %arg10[%c0_37, %c0_38] : memref<64x32xbf16, #tpu.memory_space<vmem>>, vector<64x32xbf16>
    %cst_39 = arith.constant dense<0.000000e+00> : vector<16x32xf32>
    %62 = tpu.matmul %60, %61, %cst_39 {dimension_numbers = #tpu.dot_dimension_numbers<[1], [0], [0], [1], [0, 0, 1, 1], [], []>} : vector<16x64xbf16>, vector<64x32xbf16>, vector<16x32xf32> -> vector<16x32xf32>
    %c0_40 = arith.constant 0 : index
    %c0_41 = arith.constant 0 : index
    %63 = vector.load %arg11[%c0_40, %c0_41] : memref<1x32xf32, #tpu.memory_space<vmem>>, vector<1x32xf32>
    %64 = vector.broadcast %63 : vector<1x32xf32> to vector<16x32xf32>
    %65 = arith.addf %62, %64 : vector<16x32xf32>
    %66 = arith.addf %51, %65 : vector<16x32xf32>
    %c0_42 = arith.constant 0 : index
    %c0_43 = arith.constant 0 : index
    %67 = vector.load %arg14[%c0_42, %c0_43] : memref<1x32xf32, #tpu.memory_space<vmem>>, vector<1x32xf32>
    %c0_44 = arith.constant 0 : index
    %c0_45 = arith.constant 0 : index
    %68 = vector.load %arg15[%c0_44, %c0_45] : memref<1x32xf32, #tpu.memory_space<vmem>>, vector<1x32xf32>
    %cst_46 = arith.constant dense<0.000000e+00> : vector<16xf32>
    %69 = vector.multi_reduction <add>, %66, %cst_46 [1] : vector<16x32xf32> to vector<16xf32>
    %70 = vector.shape_cast %69 : vector<16xf32> to vector<16x1xf32>
    %cst_47 = arith.constant 3.200000e+01 : f32
    %71 = vector.broadcast %cst_47 : f32 to vector<16x1xf32>
    %72 = arith.divf %70, %71 : vector<16x1xf32>
    %73 = vector.broadcast %72 : vector<16x1xf32> to vector<16x32xf32>
    %74 = arith.subf %66, %73 : vector<16x32xf32>
    %75 = arith.mulf %74, %74 : vector<16x32xf32>
    %cst_48 = arith.constant dense<0.000000e+00> : vector<16xf32>
    %76 = vector.multi_reduction <add>, %75, %cst_48 [1] : vector<16x32xf32> to vector<16xf32>
    %77 = vector.shape_cast %76 : vector<16xf32> to vector<16x1xf32>
    %cst_49 = arith.constant 3.200000e+01 : f32
    %78 = vector.broadcast %cst_49 : f32 to vector<16x1xf32>
    %79 = arith.divf %77, %78 : vector<16x1xf32>
    %80 = vector.broadcast %72 : vector<16x1xf32> to vector<16x32xf32>
    %81 = arith.subf %66, %80 : vector<16x32xf32>
    %cst_50 = arith.constant 9.99999974E-6 : f32
    %82 = vector.broadcast %cst_50 : f32 to vector<16x1xf32>
    %83 = arith.addf %79, %82 : vector<16x1xf32>
    %84 = math.rsqrt %83 : vector<16x1xf32>
    %85 = vector.broadcast %84 : vector<16x1xf32> to vector<16x32xf32>
    %86 = arith.mulf %81, %85 : vector<16x32xf32>
    %87 = vector.broadcast %67 : vector<1x32xf32> to vector<16x32xf32>
    %88 = arith.mulf %86, %87 : vector<16x32xf32>
    %89 = vector.broadcast %68 : vector<1x32xf32> to vector<16x32xf32>
    %90 = arith.addf %88, %89 : vector<16x32xf32>
    %91 = arith.mulf %20, %90 : vector<16x32xf32>
    %92 = arith.addf %91, %24 : vector<16x32xf32>
    %93 = vector.shape_cast %92 : vector<16x32xf32> to vector<2x8x32xf32>
    %c0_51 = arith.constant 0 : index
    %c0_52 = arith.constant 0 : index
    %c0_53 = arith.constant 0 : index
    %94 = vector.load %arg16[%c0_51, %c0_52, %c0_53] : memref<2x8x32xf32, #tpu.memory_space<vmem>>, vector<2x8x32xf32>
    tpu.vector_store %arg16[%c0_51, %c0_52, %c0_53], %93 {strides = array<i32>} : memref<2x8x32xf32, #tpu.memory_space<vmem>>, vector<2x8x32xf32>,
    return
  }
  func.func @transform_0(%arg0: i32) -> (i32, i32, i32) {
    %c0_i32 = arith.constant 0 : i32
    %c0_i32_0 = arith.constant 0 : i32
    %c0_i32_1 = arith.constant 0 : i32
    return %arg0, %c0_i32, %c0_i32_0 : i32, i32, i32
  }
  func.func @transform_1(%arg0: i32) -> (i32, i32, i32) {
    %c0_i32 = arith.constant 0 : i32
    %c0_i32_0 = arith.constant 0 : i32
    %c0_i32_1 = arith.constant 0 : i32
    return %arg0, %c0_i32, %c0_i32_0 : i32, i32, i32
  }
  func.func @transform_2(%arg0: i32) -> (i32, i32, i32) {
    %c0_i32 = arith.constant 0 : i32
    %c0_i32_0 = arith.constant 0 : i32
    %c0_i32_1 = arith.constant 0 : i32
    return %arg0, %c0_i32, %c0_i32_0 : i32, i32, i32
  }
  func.func @transform_3(%arg0: i32) -> (i32, i32) {
    %c0_i32 = arith.constant 0 : i32
    %c0_i32_0 = arith.constant 0 : i32
    %c0_i32_1 = arith.constant 0 : i32
    return %c0_i32, %c0_i32_0 : i32, i32
  }
  func.func @transform_4(%arg0: i32) -> (i32, i32) {
    %c0_i32 = arith.constant 0 : i32
    %c0_i32_0 = arith.constant 0 : i32
    %c0_i32_1 = arith.constant 0 : i32
    return %c0_i32, %c0_i32_0 : i32, i32
  }
  func.func @transform_5(%arg0: i32) -> (i32, i32) {
    %c0_i32 = arith.constant 0 : i32
    %c0_i32_0 = arith.constant 0 : i32
    %c0_i32_1 = arith.constant 0 : i32
    return %c0_i32, %c0_i32_0 : i32, i32
  }
  func.func @transform_6(%arg0: i32) -> (i32, i32) {
    %c0_i32 = arith.constant 0 : i32
    %c0_i32_0 = arith.constant 0 : i32
    %c0_i32_1 = arith.constant 0 : i32
    return %c0_i32, %c0_i32_0 : i32, i32
  }
  func.func @transform_7(%arg0: i32) -> (i32, i32) {
    %c0_i32 = arith.constant 0 : i32
    %c0_i32_0 = arith.constant 0 : i32
    %c0_i32_1 = arith.constant 0 : i32
    return %c0_i32, %c0_i32_0 : i32, i32
  }
  func.func @transform_8(%arg0: i32) -> (i32, i32) {
    %c0_i32 = arith.constant 0 : i32
    %c0_i32_0 = arith.constant 0 : i32
    %c0_i32_1 = arith.constant 0 : i32
    return %c0_i32, %c0_i32_0 : i32, i32
  }
  func.func @transform_9(%arg0: i32) -> (i32, i32) {
    %c0_i32 = arith.constant 0 : i32
    %c0_i32_0 = arith.constant 0 : i32
    %c0_i32_1 = arith.constant 0 : i32
    return %c0_i32, %c0_i32_0 : i32, i32
  }
  func.func @transform_10(%arg0: i32) -> (i32, i32) {
    %c0_i32 = arith.constant 0 : i32
    %c0_i32_0 = arith.constant 0 : i32
    %c0_i32_1 = arith.constant 0 : i32
    return %c0_i32, %c0_i32_0 : i32, i32
  }
  func.func @transform_11(%arg0: i32) -> (i32, i32) {
    %c0_i32 = arith.constant 0 : i32
    %c0_i32_0 = arith.constant 0 : i32
    %c0_i32_1 = arith.constant 0 : i32
    return %c0_i32, %c0_i32_0 : i32, i32
  }
  func.func @transform_12(%arg0: i32) -> (i32, i32) {
    %c0_i32 = arith.constant 0 : i32
    %c0_i32_0 = arith.constant 0 : i32
    %c0_i32_1 = arith.constant 0 : i32
    return %c0_i32, %c0_i32_0 : i32, i32
  }
  func.func @transform_13(%arg0: i32) -> (i32, i32) {
    %c0_i32 = arith.constant 0 : i32
    %c0_i32_0 = arith.constant 0 : i32
    %c0_i32_1 = arith.constant 0 : i32
    return %c0_i32, %c0_i32_0 : i32, i32
  }
  func.func @transform_14(%arg0: i32) -> (i32, i32) {
    %c0_i32 = arith.constant 0 : i32
    %c0_i32_0 = arith.constant 0 : i32
    %c0_i32_1 = arith.constant 0 : i32
    return %c0_i32, %c0_i32_0 : i32, i32
  }
  func.func @transform_15(%arg0: i32) -> (i32, i32, i32) {
    %c0_i32 = arith.constant 0 : i32
    %c0_i32_0 = arith.constant 0 : i32
    %c0_i32_1 = arith.constant 0 : i32
    return %arg0, %c0_i32, %c0_i32_0 : i32, i32, i32
  }
}

</mosaic_0001>

<llo_original>
// kernel: tpu_custom_call.1
$region0: #{tpu_custom_call.1}
  #allocation0 [shape = 'u32[]', space=smem, size = 0x4, offset = 0x4, fixed_abs, tag = 'smem constant byte address 0x4 - core index']
  #allocation1 [shape = 'u32[144,128]{1,0:T(1,128)}', space=vmem, size = 0x12000, scoped, tag = 'internal scratch']
  #allocation2 [shape = 'f32[16,96]{1,0:T(8,128)}', space=vmem, size = 0x2000, scoped, tag = 'scratch operand']
  #allocation3 [shape = 'f32[16,32]{1,0:T(8,128)}', space=vmem, size = 0x2000, scoped, tag = 'scratch operand']
  %s0 = inlined_call_operand.hbm [shape: f32[2,8,32], index: 0, kind: input, shape index: {}]
  %s1 = inlined_call_operand.hbm [shape: f32[2,1,32], index: 1, kind: input, shape index: {}]
  %s2 = inlined_call_operand.hbm [shape: f32[2,1,32], index: 2, kind: input, shape index: {}]
  %s3 = inlined_call_operand.hbm [shape: bf16[32,96], index: 3, kind: input, shape index: {}]
  %s4 = inlined_call_operand.hbm [shape: f32[1,96], index: 4, kind: input, shape index: {}]
  %s5 = inlined_call_operand.hbm [shape: bf16[32,32], index: 5, kind: input, shape index: {}]
  %s6 = inlined_call_operand.hbm [shape: f32[1,32], index: 6, kind: input, shape index: {}]
  %s7 = inlined_call_operand.hbm [shape: bf16[32,64], index: 7, kind: input, shape index: {}]
  %s8 = inlined_call_operand.hbm [shape: f32[1,64], index: 8, kind: input, shape index: {}]
  %s9 = inlined_call_operand.hbm [shape: bf16[64,32], index: 9, kind: input, shape index: {}]
  %s10 = inlined_call_operand.hbm [shape: f32[1,32], index: 10, kind: input, shape index: {}]
  %s11 = inlined_call_operand.hbm [shape: f32[1,32], index: 11, kind: input, shape index: {}]
  %s12 = inlined_call_operand.hbm [shape: f32[1,32], index: 12, kind: input, shape index: {}]
  %s13 = inlined_call_operand.hbm [shape: f32[1,32], index: 13, kind: input, shape index: {}]
  %s14 = inlined_call_operand.hbm [shape: f32[1,32], index: 14, kind: input, shape index: {}]
  %s15 = inlined_call_operand.hbm [shape: f32[2,8,32], index: 15, kind: output, shape index: {}]
  %s16 = sld [smem:[#allocation0]]
  $region137: #{tpu_custom_call.1} parent=0
    _
  %s18 = ssub.s32 1, %s16
  %s19 = scalar_select 0, %s18, %s16
  $region1: #{tpu_custom_call.1} parent=0
    #allocation4 [shape = 'u8[8192]{0}', space=vmem, size = 0x2000, scoped, tag = 'input window, operand 0, single buffered']
    #allocation5 [shape = 's32[1]{0}', space=sflag, size = 0x4, scoped, tag = 'scoped memory for tpu_custom_call.1']
    #allocation6 [shape = 's32[1]{0}', space=sflag, size = 0x4, scoped, tag = 'scoped memory for tpu_custom_call.1']
    #allocation7 [shape = 'u8[1024]{0}', space=vmem, size = 0x400, scoped, tag = 'input window, operand 1, single buffered']
    #allocation8 [shape = 's32[1]{0}', space=sflag, size = 0x4, scoped, tag = 'scoped memory for tpu_custom_call.1']
    #allocation9 [shape = 'u8[1024]{0}', space=vmem, size = 0x400, scoped, tag = 'input window, operand 2, single buffered']
    #allocation10 [shape = 'u8[8192]{0}', space=vmem, size = 0x2000, scoped, tag = 'input window, operand 3, single buffered']
    #allocation11 [shape = 's32[1]{0}', space=sflag, size = 0x4, scoped, tag = 'scoped memory for tpu_custom_call.1']
    #allocation12 [shape = 'u8[512]{0}', space=vmem, size = 0x400, scoped, tag = 'input window, operand 4, single buffered']
    #allocation13 [shape = 'u8[8192]{0}', space=vmem, size = 0x2000, scoped, tag = 'input window, operand 5, single buffered']
    #allocation14 [shape = 's32[1]{0}', space=sflag, size = 0x4, scoped, tag = 'scoped memory for tpu_custom_call.1']
    #allocation15 [shape = 'u8[512]{0}', space=vmem, size = 0x400, scoped, tag = 'input window, operand 6, single buffered']
    #allocation16 [shape = 'u8[8192]{0}', space=vmem, size = 0x2000, scoped, tag = 'input window, operand 7, single buffered']
    #allocation17 [shape = 's32[1]{0}', space=sflag, size = 0x4, scoped, tag = 'scoped memory for tpu_custom_call.1']
    #allocation18 [shape = 'u8[512]{0}', space=vmem, size = 0x400, scoped, tag = 'input window, operand 8, single buffered']
    #allocation19 [shape = 'u8[16384]{0}', space=vmem, size = 0x4000, scoped, tag = 'input window, operand 9, single buffered']
    #allocation20 [shape = 's32[1]{0}', space=sflag, size = 0x4, scoped, tag = 'scoped memory for tpu_custom_call.1']
    #allocation21 [shape = 'u8[512]{0}', space=vmem, size = 0x400, scoped, tag = 'input window, operand 10, single buffered']
    #allocation22 [shape = 'u8[512]{0}', space=vmem, size = 0x400, scoped, tag = 'input window, operand 11, single buffered']
    #allocation23 [shape = 's32[1]{0}', space=sflag, size = 0x4, scoped, tag = 'scoped memory for tpu_custom_call.1']
    #allocation24 [shape = 'u8[512]{0}', space=vmem, size = 0x400, scoped, tag = 'input window, operand 12, single buffered']
    #allocation25 [shape = 'u8[512]{0}', space=vmem, size = 0x400, scoped, tag = 'input window, operand 13, single buffered']
    #allocation26 [shape = 's32[1]{0}', space=sflag, size = 0x4, scoped, tag = 'scoped memory for tpu_custom_call.1']
    #allocation27 [shape = 'u8[512]{0}', space=vmem, size = 0x400, scoped, tag = 'input window, operand 14, single buffered']
    #allocation28 [shape = 'u8[8192]{0}', space=vmem, size = 0x2000, scoped, tag = 'output window, operand 0, single buffered']
    %20 = vsyncpa [#allocation5], 0
    %21 = vsyncpa [#allocation8], 0
    %22 = vsyncpa [#allocation11], 0
    %23 = vsyncpa [#allocation14], 0
    %24 = vsyncpa [#allocation17], 0
    %25 = vsyncpa [#allocation20], 0
    %26 = vsyncpa [#allocation23], 0
    %27 = vsyncpa [#allocation26], 0
    %28 = vsyncpa [#allocation6], 0
    // Predicated region
    $region2: #{tpu_custom_call.1} parent=1 // pred_check
      _
    $region3: #{tpu_custom_call.1} parent=1 // pred_check_branch
      %30 = sbr.rel (0) target = $region5
    $region4: #{tpu_custom_call.1} parent=1 // pred_region
      %s32 = ssub.s32 256, 256
      %33 = vsyncadd [#allocation5], %s32
      %s34 = sshll.u32 [#allocation4], 4
      %s35 = int_to_ptr.vmem [resolvable:$true] %s34
      %40 = dma.hbm_to_vmem [thread:$0]  %s0, 256, %s35, [#allocation5], 128, 128, 8
    $region5: #{tpu_custom_call.1} parent=1 // pred_fallthru
      _
    // Predicated region
    $region6: #{tpu_custom_call.1} parent=1 // pred_check
      _
    $region7: #{tpu_custom_call.1} parent=1 // pred_check_branch
      %42 = sbr.rel (0) target = $region9
    $region8: #{tpu_custom_call.1} parent=1 // pred_region
      %s44 = ssub.s32 32, 32
      %45 = vsyncadd [#allocation8], %s44
      %s46 = sshll.u32 [#allocation7], 4
      %s47 = int_to_ptr.vmem [resolvable:$true] %s46
      %52 = dma.hbm_to_vmem [thread:$0]  %s1, 32, %s47, [#allocation8], 16, 16, 1
    $region9: #{tpu_custom_call.1} parent=1 // pred_fallthru
      _
    // Predicated region
    $region10: #{tpu_custom_call.1} parent=1 // pred_check
      _
    $region11: #{tpu_custom_call.1} parent=1 // pred_check_branch
      %54 = sbr.rel (0) target = $region13
    $region12: #{tpu_custom_call.1} parent=1 // pred_region
      %s56 = ssub.s32 32, 32
      %57 = vsyncadd [#allocation8], %s56
      %s58 = sshll.u32 [#allocation9], 4
      %s59 = int_to_ptr.vmem [resolvable:$true] %s58
      %64 = dma.hbm_to_vmem [thread:$0]  %s2, 32, %s59, [#allocation8], 16, 16, 1
    $region13: #{tpu_custom_call.1} parent=1 // pred_fallthru
      _
    // Predicated region
    $region14: #{tpu_custom_call.1} parent=1 // pred_check
      _
    $region15: #{tpu_custom_call.1} parent=1 // pred_check_branch
      %66 = sbr.rel (0) target = $region17
    $region16: #{tpu_custom_call.1} parent=1 // pred_region
      %s68 = ssub.s32 256, 256
      %69 = vsyncadd [#allocation11], %s68
      %s70 = sshll.u32 [#allocation10], 4
      %s71 = int_to_ptr.vmem [resolvable:$true] %s70
      %76 = dma.hbm_to_vmem [thread:$0]  %s3, 256, %s71, [#allocation11], 64, 64, 4
    $region17: #{tpu_custom_call.1} parent=1 // pred_fallthru
      _
    // Predicated region
    $region18: #{tpu_custom_call.1} parent=1 // pred_check
      _
    $region19: #{tpu_custom_call.1} parent=1 // pred_check_branch
      %78 = sbr.rel (0) target = $region21
    $region20: #{tpu_custom_call.1} parent=1 // pred_region
      %s80 = ssub.s32 16, 16
      %81 = vsyncadd [#allocation11], %s80
      %s83 = sshll.u32 [#allocation12], 4
      %s84 = int_to_ptr.vmem [resolvable:$true] %s83
      %86 = dma.hbm_to_vmem [thread:$0]  %s4, 16, %s84, [#allocation11]
    $region21: #{tpu_custom_call.1} parent=1 // pred_fallthru
      _
    // Predicated region
    $region22: #{tpu_custom_call.1} parent=1 // pred_check
      _
    $region23: #{tpu_custom_call.1} parent=1 // pred_check_branch
      %88 = sbr.rel (0) target = $region25
    $region24: #{tpu_custom_call.1} parent=1 // pred_region
      %s90 = ssub.s32 256, 256
      %91 = vsyncadd [#allocation14], %s90
      %s92 = sshll.u32 [#allocation13], 4
      %s93 = int_to_ptr.vmem [resolvable:$true] %s92
      %98 = dma.hbm_to_vmem [thread:$0]  %s5, 256, %s93, [#allocation14], 64, 64, 4
    $region25: #{tpu_custom_call.1} parent=1 // pred_fallthru
      _
    // Predicated region
    $region26: #{tpu_custom_call.1} parent=1 // pred_check
      _
    $region27: #{tpu_custom_call.1} parent=1 // pred_check_branch
      %100 = sbr.rel (0) target = $region29
    $region28: #{tpu_custom_call.1} parent=1 // pred_region
      %s102 = ssub.s32 16, 16
      %103 = vsyncadd [#allocation14], %s102
      %s105 = sshll.u32 [#allocation15], 4
      %s106 = int_to_ptr.vmem [resolvable:$true] %s105
      %108 = dma.hbm_to_vmem [thread:$0]  %s6, 16, %s106, [#allocation14]
    $region29: #{tpu_custom_call.1} parent=1 // pred_fallthru
      _
    // Predicated region
    $region30: #{tpu_custom_call.1} parent=1 // pred_check
      _
    $region31: #{tpu_custom_call.1} parent=1 // pred_check_branch
      %110 = sbr.rel (0) target = $region33
    $region32: #{tpu_custom_call.1} parent=1 // pred_region
      %s112 = ssub.s32 256, 256
      %113 = vsyncadd [#allocation17], %s112
      %s114 = sshll.u32 [#allocation16], 4
      %s115 = int_to_ptr.vmem [resolvable:$true] %s114
      %120 = dma.hbm_to_vmem [thread:$0]  %s7, 256, %s115, [#allocation17], 64, 64, 4
    $region33: #{tpu_custom_call.1} parent=1 // pred_fallthru
      _
    // Predicated region
    $region34: #{tpu_custom_call.1} parent=1 // pred_check
      _
    $region35: #{tpu_custom_call.1} parent=1 // pred_check_branch
      %122 = sbr.rel (0) target = $region37
    $region36: #{tpu_custom_call.1} parent=1 // pred_region
      %s124 = ssub.s32 16, 16
      %125 = vsyncadd [#allocation17], %s124
      %s127 = sshll.u32 [#allocation18], 4
      %s128 = int_to_ptr.vmem [resolvable:$true] %s127
      %130 = dma.hbm_to_vmem [thread:$0]  %s8, 16, %s128, [#allocation17]
    $region37: #{tpu_custom_call.1} parent=1 // pred_fallthru
      _
    // Predicated region
    $region38: #{tpu_custom_call.1} parent=1 // pred_check
      _
    $region39: #{tpu_custom_call.1} parent=1 // pred_check_branch
      %132 = sbr.rel (0) target = $region41
    $region40: #{tpu_custom_call.1} parent=1 // pred_region
      %s134 = ssub.s32 512, 512
      %135 = vsyncadd [#allocation20], %s134
      %s136 = sshll.u32 [#allocation19], 4
      %s137 = int_to_ptr.vmem [resolvable:$true] %s136
      %142 = dma.hbm_to_vmem [thread:$0]  %s9, 512, %s137, [#allocation20], 64, 64, 4
    $region41: #{tpu_custom_call.1} parent=1 // pred_fallthru
      _
    // Predicated region
    $region42: #{tpu_custom_call.1} parent=1 // pred_check
      _
    $region43: #{tpu_custom_call.1} parent=1 // pred_check_branch
      %144 = sbr.rel (0) target = $region45
    $region44: #{tpu_custom_call.1} parent=1 // pred_region
      %s146 = ssub.s32 16, 16
      %147 = vsyncadd [#allocation20], %s146
      %s149 = sshll.u32 [#allocation21], 4
      %s150 = int_to_ptr.vmem [resolvable:$true] %s149
      %152 = dma.hbm_to_vmem [thread:$0]  %s10, 16, %s150, [#allocation20]
    $region45: #{tpu_custom_call.1} parent=1 // pred_fallthru
      _
    // Predicated region
    $region46: #{tpu_custom_call.1} parent=1 // pred_check
      _
    $region47: #{tpu_custom_call.1} parent=1 // pred_check_branch
      %154 = sbr.rel (0) target = $region49
    $region48: #{tpu_custom_call.1} parent=1 // pred_region
      %s156 = ssub.s32 16, 16
      %157 = vsyncadd [#allocation23], %s156
      %s159 = sshll.u32 [#allocation22], 4
      %s160 = int_to_ptr.vmem [resolvable:$true] %s159
      %162 = dma.hbm_to_vmem [thread:$0]  %s11, 16, %s160, [#allocation23]
    $region49: #{tpu_custom_call.1} parent=1 // pred_fallthru
      _
    // Predicated region
    $region50: #{tpu_custom_call.1} parent=1 // pred_check
      _
    $region51: #{tpu_custom_call.1} parent=1 // pred_check_branch
      %164 = sbr.rel (0) target = $region53
    $region52: #{tpu_custom_call.1} parent=1 // pred_region
      %s166 = ssub.s32 16, 16
      %167 = vsyncadd [#allocation23], %s166
      %s169 = sshll.u32 [#allocation24], 4
      %s170 = int_to_ptr.vmem [resolvable:$true] %s169
      %172 = dma.hbm_to_vmem [thread:$0]  %s12, 16, %s170, [#allocation23]
    $region53: #{tpu_custom_call.1} parent=1 // pred_fallthru
      _
    // Predicated region
    $region54: #{tpu_custom_call.1} parent=1 // pred_check
      _
    $region55: #{tpu_custom_call.1} parent=1 // pred_check_branch
      %174 = sbr.rel (0) target = $region57
    $region56: #{tpu_custom_call.1} parent=1 // pred_region
      %s176 = ssub.s32 16, 16
      %177 = vsyncadd [#allocation26], %s176
      %s179 = sshll.u32 [#allocation25], 4
      %s180 = int_to_ptr.vmem [resolvable:$true] %s179
      %182 = dma.hbm_to_vmem [thread:$0]  %s13, 16, %s180, [#allocation26]
    $region57: #{tpu_custom_call.1} parent=1 // pred_fallthru
      _
    // Predicated region
    $region58: #{tpu_custom_call.1} parent=1 // pred_check
      _
    $region59: #{tpu_custom_call.1} parent=1 // pred_check_branch
      %184 = sbr.rel (0) target = $region61
    $region60: #{tpu_custom_call.1} parent=1 // pred_region
      %s186 = ssub.s32 16, 16
      %187 = vsyncadd [#allocation26], %s186
      %s189 = sshll.u32 [#allocation27], 4
      %s190 = int_to_ptr.vmem [resolvable:$true] %s189
      %192 = dma.hbm_to_vmem [thread:$0]  %s14, 16, %s190, [#allocation26]
    $region61: #{tpu_custom_call.1} parent=1 // pred_fallthru
      _
    // Predicated region
    $region62: #{tpu_custom_call.1} parent=1 // pred_check
      _
    $region63: #{tpu_custom_call.1} parent=1 // pred_check_branch
      %194 = sbr.rel (0) target = $region65
    $region64: #{tpu_custom_call.1} parent=1 // pred_region
      %195 = dma.done [#allocation5], 256
    $region65: #{tpu_custom_call.1} parent=1 // pred_fallthru
      _
    // Predicated region
    $region66: #{tpu_custom_call.1} parent=1 // pred_check
      _
    $region67: #{tpu_custom_call.1} parent=1 // pred_check_branch
      %197 = sbr.rel (0) target = $region69
    $region68: #{tpu_custom_call.1} parent=1 // pred_region
      %198 = dma.done [#allocation8], 32
    $region69: #{tpu_custom_call.1} parent=1 // pred_fallthru
      _
    // Predicated region
    $region70: #{tpu_custom_call.1} parent=1 // pred_check
      _
    $region71: #{tpu_custom_call.1} parent=1 // pred_check_branch
      %200 = sbr.rel (0) target = $region73
    $region72: #{tpu_custom_call.1} parent=1 // pred_region
      %201 = dma.done [#allocation8], 32
    $region73: #{tpu_custom_call.1} parent=1 // pred_fallthru
      _
    // Predicated region
    $region74: #{tpu_custom_call.1} parent=1 // pred_check
      _
    $region75: #{tpu_custom_call.1} parent=1 // pred_check_branch
      %203 = sbr.rel (0) target = $region77
    $region76: #{tpu_custom_call.1} parent=1 // pred_region
      %204 = dma.done [#allocation11], 256
    $region77: #{tpu_custom_call.1} parent=1 // pred_fallthru
      _
    // Predicated region
    $region78: #{tpu_custom_call.1} parent=1 // pred_check
      _
    $region79: #{tpu_custom_call.1} parent=1 // pred_check_branch
      %206 = sbr.rel (0) target = $region81
    $region80: #{tpu_custom_call.1} parent=1 // pred_region
      %207 = dma.done [#allocation11], 16
    $region81: #{tpu_custom_call.1} parent=1 // pred_fallthru
      _
    // Predicated region
    $region82: #{tpu_custom_call.1} parent=1 // pred_check
      _
    $region83: #{tpu_custom_call.1} parent=1 // pred_check_branch
      %209 = sbr.rel (0) target = $region85
    $region84: #{tpu_custom_call.1} parent=1 // pred_region
      %210 = dma.done [#allocation14], 256
    $region85: #{tpu_custom_call.1} parent=1 // pred_fallthru
      _
    // Predicated region
    $region86: #{tpu_custom_call.1} parent=1 // pred_check
      _
    $region87: #{tpu_custom_call.1} parent=1 // pred_check_branch
      %212 = sbr.rel (0) target = $region89
    $region88: #{tpu_custom_call.1} parent=1 // pred_region
      %213 = dma.done [#allocation14], 16
    $region89: #{tpu_custom_call.1} parent=1 // pred_fallthru
      _
    // Predicated region
    $region90: #{tpu_custom_call.1} parent=1 // pred_check
      _
    $region91: #{tpu_custom_call.1} parent=1 // pred_check_branch
      %215 = sbr.rel (0) target = $region93
    $region92: #{tpu_custom_call.1} parent=1 // pred_region
      %216 = dma.done [#allocation17], 256
    $region93: #{tpu_custom_call.1} parent=1 // pred_fallthru
      _
    // Predicated region
    $region94: #{tpu_custom_call.1} parent=1 // pred_check
      _
    $region95: #{tpu_custom_call.1} parent=1 // pred_check_branch
      %218 = sbr.rel (0) target = $region97
    $region96: #{tpu_custom_call.1} parent=1 // pred_region
      %219 = dma.done [#allocation17], 16
    $region97: #{tpu_custom_call.1} parent=1 // pred_fallthru
      _
    // Predicated region
    $region98: #{tpu_custom_call.1} parent=1 // pred_check
      _
    $region99: #{tpu_custom_call.1} parent=1 // pred_check_branch
      %221 = sbr.rel (0) target = $region101
    $region100: #{tpu_custom_call.1} parent=1 // pred_region
      %222 = dma.done [#allocation20], 512
    $region101: #{tpu_custom_call.1} parent=1 // pred_fallthru
      _
    // Predicated region
    $region102: #{tpu_custom_call.1} parent=1 // pred_check
      _
    $region103: #{tpu_custom_call.1} parent=1 // pred_check_branch
      %224 = sbr.rel (0) target = $region105
    $region104: #{tpu_custom_call.1} parent=1 // pred_region
      %225 = dma.done [#allocation20], 16
    $region105: #{tpu_custom_call.1} parent=1 // pred_fallthru
      _
    // Predicated region
    $region106: #{tpu_custom_call.1} parent=1 // pred_check
      _
    $region107: #{tpu_custom_call.1} parent=1 // pred_check_branch
      %227 = sbr.rel (0) target = $region109
    $region108: #{tpu_custom_call.1} parent=1 // pred_region
      %228 = dma.done [#allocation23], 16
    $region109: #{tpu_custom_call.1} parent=1 // pred_fallthru
      _
    // Predicated region
    $region110: #{tpu_custom_call.1} parent=1 // pred_check
      _
    $region111: #{tpu_custom_call.1} parent=1 // pred_check_branch
      %230 = sbr.rel (0) target = $region113
    $region112: #{tpu_custom_call.1} parent=1 // pred_region
      %231 = dma.done [#allocation23], 16
    $region113: #{tpu_custom_call.1} parent=1 // pred_fallthru
      _
    // Predicated region
    $region114: #{tpu_custom_call.1} parent=1 // pred_check
      _
    $region115: #{tpu_custom_call.1} parent=1 // pred_check_branch
      %233 = sbr.rel (0) target = $region117
    $region116: #{tpu_custom_call.1} parent=1 // pred_region
      %234 = dma.done [#allocation26], 16
    $region117: #{tpu_custom_call.1} parent=1 // pred_fallthru
      _
    // Predicated region
    $region118: #{tpu_custom_call.1} parent=1 // pred_check
      _
    $region119: #{tpu_custom_call.1} parent=1 // pred_check_branch
      %236 = sbr.rel (0) target = $region121
    $region120: #{tpu_custom_call.1} parent=1 // pred_region
      %237 = dma.done [#allocation26], 16
    $region121: #{tpu_custom_call.1} parent=1 // pred_fallthru
      _
    %v239 = vld [vmem:[#allocation4] sm:$0xff]
    %v240 = vld [vmem:[#allocation4 + $0x8] sm:$0xff]
    %v241 = vpack.c.bf16 %v240, %v239
    %v242 = vld [vmem:[#allocation10] sm:$0xf]
    %v243 = vld [vmem:[#allocation10 + $0x4] sm:$0xf]
    %v244 = vld [vmem:[#allocation10 + $0x8] sm:$0xf]
    %v245 = vld [vmem:[#allocation10 + $0xc] sm:$0xf]
    %v246 = vld [vmem:[#allocation12] sm:$0x1]
    %v248 = vlaneseq
    %v249 = vshrl.u32 %v248, 7
    %v250 = vsub.s32 0, %v249
    %v251 = vrot.slane %v246, %v250
    %v257 = vunpack.c.l.b16 %v242
    %v258 = vunpack.c.l.b16 %v243
    %v259 = vunpack.c.l.b16 %v244
    %v260 = vunpack.c.l.b16 %v245
    %v261 = vpack.c.b16 %v258, %v257
    %v262 = vpack.c.b16 %v260, %v259
    %vm265 = vcmask 261120
    %v267 = vsel %vm265, %v241, 0
    %269 = vmatprep.subr.bf16.mxu0 0
    %270 = vmatpush1.bf16.msra.mxu0 %v261
    %271 = vmatprep.subr.bf16.mxu0 0
    %272 = vmatpush1.bf16.msra.mxu0 %v262
    %273 = vmatprep.subr.bf16.mxu0 0
    %274 = vmatpush1.bf16.msra.mxu0 0
    %275 = vmatprep.subr.bf16.mxu0 0
    %276 = vmatpush1.bf16.msra.mxu0 0
    %277 = vmatprep.subr.bf16.mxu0 0
    %278 = vmatpush1.bf16.msra.mxu0 0
    %279 = vmatprep.subr.bf16.mxu0 0
    %280 = vmatpush1.bf16.msra.mxu0 0
    %281 = vmatprep.subr.bf16.mxu0 0
    %282 = vmatpush1.bf16.msra.mxu0 0
    %283 = vmatprep.subr.bf16.mxu0 0
    %284 = vmatpush1.bf16.msra.mxu0 0
    %285 = vmatprep.subr.bf16.mxu0 0
    %286 = vmatpush1.bf16.msra.mxu0 0
    %287 = vmatprep.subr.bf16.mxu0 0
    %288 = vmatpush1.bf16.msra.mxu0 0
    %289 = vmatprep.subr.bf16.mxu0 0
    %290 = vmatpush1.bf16.msra.mxu0 0
    %291 = vmatprep.subr.bf16.mxu0 0
    %292 = vmatpush1.bf16.msra.mxu0 0
    %293 = vmatprep.subr.bf16.mxu0 0
    %294 = vmatpush1.bf16.msra.mxu0 0
    %295 = vmatprep.subr.bf16.mxu0 0
    %296 = vmatpush1.bf16.msra.mxu0 0
    %297 = vmatprep.subr.bf16.mxu0 0
    %298 = vmatpush1.bf16.msra.mxu0 0
    %299 = vmatprep.subr.bf16.mxu0 0
    %300 = vmatpush1.bf16.msra.mxu0 0
    %301 = vmatprep.mubr.bf16.mxu0 0
    %302 = vmatmul.mubr.bf16.gmra.mrb[0].mxu0 %v267
    %v303 = vpop.f32.mrb[0].mxu0
    %v304 = vadd.f32 %v251, %v303
    %v305 = vpop.f32.mrb[0].mxu0
    %v306 = vpop.f32.mrb[0].mxu0
    %v307 = vadd.f32 %v251, %v306
    %v308 = vpop.f32.mrb[0].mxu0
    %309 = vdwg.mxu0
    %vm310 = vcmask 785408
    %311 = vst.msk [vmem:[#allocation2] sm:$0xff] %vm310, %v304
    %312 = vst.msk [vmem:[#allocation2 + $0x8] sm:$0xff] %vm310, %v307
    loop: start=0, step=1, limit=2
    $region122: #{tpu_custom_call.1} parent=1 // loop_pre_header
      _
    $region123: #{tpu_custom_call.1} parent=1 // loop_header
      %s314 = sphi 0, %s318
      %p315 = scmp.ge.s32.totalorder %s314, 2
    $region124: #{tpu_custom_call.1} parent=1 // loop_header_branch
      %317 = sbr.rel (%p315) target = $region128
    $region125: #{tpu_custom_call.1} parent=1 // loop_body
      %s319 = smul.u32 %s314, 8
      %s320 = scalar_lea.vmem [#allocation2], %s319
      %v321 = vld [vmem:[%s320] sm:$0xff]
      %v322 = vpack.c.bf16 %v321, %v321
      %324 = vrot.lane.b32.xlu0 %v322, 96
      %v325 = vpop.permute.xlu0 %324
      %vm326 = vcmask 64512
      %v328 = vsel %vm326, %v322, 0
      %v331 = vsel %vm326, %v325, 0
      %333 = vmatprep.subr.bf16.mxu0 0
      %334 = vmatpush1.bf16.xpose.msra.mxu0 %v331
      %335 = vmatprep.subr.bf16.mxu0 0
      %336 = vmatpush1.bf16.xpose.msra.mxu0 0
      %337 = vmatprep.subr.bf16.mxu0 0
      %338 = vmatpush1.bf16.xpose.msra.mxu0 0
      %339 = vmatprep.subr.bf16.mxu0 0
      %340 = vmatpush1.bf16.xpose.msra.mxu0 0
      %341 = vmatprep.subr.bf16.mxu0 0
      %342 = vmatpush1.bf16.xpose.msra.mxu0 0
      %343 = vmatprep.subr.bf16.mxu0 0
      %344 = vmatpush1.bf16.xpose.msra.mxu0 0
      %345 = vmatprep.subr.bf16.mxu0 0
      %346 = vmatpush1.bf16.xpose.msra.mxu0 0
      %347 = vmatprep.subr.bf16.mxu0 0
      %348 = vmatpush1.bf16.xpose.msra.mxu0 0
      %349 = vmatprep.subr.bf16.mxu0 0
      %350 = vmatpush1.bf16.xpose.msra.mxu0 0
      %351 = vmatprep.subr.bf16.mxu0 0
      %352 = vmatpush1.bf16.xpose.msra.mxu0 0
      %353 = vmatprep.subr.bf16.mxu0 0
      %354 = vmatpush1.bf16.xpose.msra.mxu0 0
      %355 = vmatprep.subr.bf16.mxu0 0
      %356 = vmatpush1.bf16.xpose.msra.mxu0 0
      %357 = vmatprep.subr.bf16.mxu0 0
      %358 = vmatpush1.bf16.xpose.msra.mxu0 0
      %359 = vmatprep.subr.bf16.mxu0 0
      %360 = vmatpush1.bf16.xpose.msra.mxu0 0
      %361 = vmatprep.subr.bf16.mxu0 0
      %362 = vmatpush1.bf16.xpose.msra.mxu0 0
      %363 = vmatprep.subr.bf16.mxu0 0
      %364 = vmatpush1.bf16.xpose.msra.mxu0 0
      %365 = vmatprep.mubr.bf16.mxu0 0
      %366 = vmatmul.mubr.bf16.gmra.mrb[0].mxu0 %v328
      %v367 = vpop.f32.mrb[0].mxu0
      %v368 = vadd.f32 0.0, %v367
      %v369 = vpop.f32.mrb[0].mxu0
      %v370 = vpop.f32.mrb[0].mxu0
      %v371 = vpop.f32.mrb[0].mxu0
      %372 = vdwg.mxu0
      %v373 = vmul.f32 %v368, 0.35355338
      %v374 = vsel %vm326, %v373, -inf
      %375 = vmax.xlane.f32.xlu0 %v374
      %v376 = vpop.xlane.xlu0 %375
      %v377 = vsub.f32 %v373, %v376
      %v378 = vmul.f32 %v377, 1.442695
      %v379 = vpow.pop %v378
      %v380 = vsel %vm326, %v379, 0.0
      %381 = vadd.xlane.f32.xlu0 %v380
      %v382 = vpop.xlane.xlu0 %381
      %v383 = vrcp.pop %v382
      %v384 = vmul.f32 %v379, %v383
      %v385 = vpack.c.bf16 %v384, %v384
      %386 = vrot.lane.b32.xlu0 %v322, 64
      %v387 = vpop.permute.xlu0 %386
      %v389 = vsel %vm326, %v385, 0
      %vm391 = vcmask 1043456
      %v393 = vsel %vm391, %v387, 0
      %395 = vmatprep.subr.bf16.mxu0 0
      %396 = vmatpush1.bf16.msra.mxu0 %v393
      %397 = vmatprep.subr.bf16.mxu0 0
      %398 = vmatpush1.bf16.msra.mxu0 0
      %399 = vmatprep.subr.bf16.mxu0 0
      %400 = vmatpush1.bf16.msra.mxu0 0
      %401 = vmatprep.subr.bf16.mxu0 0
      %402 = vmatpush1.bf16.msra.mxu0 0
      %403 = vmatprep.subr.bf16.mxu0 0
      %404 = vmatpush1.bf16.msra.mxu0 0
      %405 = vmatprep.subr.bf16.mxu0 0
      %406 = vmatpush1.bf16.msra.mxu0 0
      %407 = vmatprep.subr.bf16.mxu0 0
      %408 = vmatpush1.bf16.msra.mxu0 0
      %409 = vmatprep.subr.bf16.mxu0 0
      %410 = vmatpush1.bf16.msra.mxu0 0
      %411 = vmatprep.subr.bf16.mxu0 0
      %412 = vmatpush1.bf16.msra.mxu0 0
      %413 = vmatprep.subr.bf16.mxu0 0
      %414 = vmatpush1.bf16.msra.mxu0 0
      %415 = vmatprep.subr.bf16.mxu0 0
      %416 = vmatpush1.bf16.msra.mxu0 0
      %417 = vmatprep.subr.bf16.mxu0 0
      %418 = vmatpush1.bf16.msra.mxu0 0
      %419 = vmatprep.subr.bf16.mxu0 0
      %420 = vmatpush1.bf16.msra.mxu0 0
      %421 = vmatprep.subr.bf16.mxu0 0
      %422 = vmatpush1.bf16.msra.mxu0 0
      %423 = vmatprep.subr.bf16.mxu0 0
      %424 = vmatpush1.bf16.msra.mxu0 0
      %425 = vmatprep.subr.bf16.mxu0 0
      %426 = vmatpush1.bf16.msra.mxu0 0
      %427 = vmatprep.mubr.bf16.mxu0 0
      %428 = vmatmul.mubr.bf16.gmra.mrb[0].mxu0 %v389
      %v429 = vpop.f32.mrb[0].mxu0
      %v430 = vadd.f32 0.0, %v429
      %v431 = vpop.f32.mrb[0].mxu0
      %v432 = vpop.f32.mrb[0].mxu0
      %v433 = vpop.f32.mrb[0].mxu0
      %434 = vdwg.mxu0
      %s435 = scalar_lea.vmem [#allocation3], %s319
      %436 = vst.msk [vmem:[%s435] sm:$0xff] %vm326, %v430
      %v437 = vld [vmem:[%s320] sm:$0xff]
      %v438 = vpack.c.bf16 %v437, %v437
      %440 = vrot.lane.b32.xlu0 %v438, 120
      %v441 = vpop.permute.xlu0 %440
      %442 = vrot.lane.b32.xlu0 %v438, 88
      %v443 = vpop.permute.xlu0 %442
      %v445 = vsel %vm326, %v441, 0
      %v448 = vsel %vm326, %v443, 0
      %450 = vmatprep.subr.bf16.mxu0 0
      %451 = vmatpush1.bf16.xpose.msra.mxu0 %v448
      %452 = vmatprep.subr.bf16.mxu0 0
      %453 = vmatpush1.bf16.xpose.msra.mxu0 0
      %454 = vmatprep.subr.bf16.mxu0 0
      %455 = vmatpush1.bf16.xpose.msra.mxu0 0
      %456 = vmatprep.subr.bf16.mxu0 0
      %457 = vmatpush1.bf16.xpose.msra.mxu0 0
      %458 = vmatprep.subr.bf16.mxu0 0
      %459 = vmatpush1.bf16.xpose.msra.mxu0 0
      %460 = vmatprep.subr.bf16.mxu0 0
      %461 = vmatpush1.bf16.xpose.msra.mxu0 0
      %462 = vmatprep.subr.bf16.mxu0 0
      %463 = vmatpush1.bf16.xpose.msra.mxu0 0
      %464 = vmatprep.subr.bf16.mxu0 0
      %465 = vmatpush1.bf16.xpose.msra.mxu0 0
      %466 = vmatprep.subr.bf16.mxu0 0
      %467 = vmatpush1.bf16.xpose.msra.mxu0 0
      %468 = vmatprep.subr.bf16.mxu0 0
      %469 = vmatpush1.bf16.xpose.msra.mxu0 0
      %470 = vmatprep.subr.bf16.mxu0 0
      %471 = vmatpush1.bf16.xpose.msra.mxu0 0
      %472 = vmatprep.subr.bf16.mxu0 0
      %473 = vmatpush1.bf16.xpose.msra.mxu0 0
      %474 = vmatprep.subr.bf16.mxu0 0
      %475 = vmatpush1.bf16.xpose.msra.mxu0 0
      %476 = vmatprep.subr.bf16.mxu0 0
      %477 = vmatpush1.bf16.xpose.msra.mxu0 0
      %478 = vmatprep.subr.bf16.mxu0 0
      %479 = vmatpush1.bf16.xpose.msra.mxu0 0
      %480 = vmatprep.subr.bf16.mxu0 0
      %481 = vmatpush1.bf16.xpose.msra.mxu0 0
      %482 = vmatprep.mubr.bf16.mxu0 0
      %483 = vmatmul.mubr.bf16.gmra.mrb[0].mxu0 %v445
      %v484 = vpop.f32.mrb[0].mxu0
      %v485 = vadd.f32 0.0, %v484
      %v486 = vpop.f32.mrb[0].mxu0
      %v487 = vpop.f32.mrb[0].mxu0
      %v488 = vpop.f32.mrb[0].mxu0
      %489 = vdwg.mxu0
      %v490 = vmul.f32 %v485, 0.35355338
      %v491 = vsel %vm326, %v490, -inf
      %492 = vmax.xlane.f32.xlu0 %v491
      %v493 = vpop.xlane.xlu0 %492
      %v494 = vsub.f32 %v490, %v493
      %v495 = vmul.f32 %v494, 1.442695
      %v496 = vpow.pop %v495
      %v497 = vsel %vm326, %v496, 0.0
      %498 = vadd.xlane.f32.xlu0 %v497
      %v499 = vpop.xlane.xlu0 %498
      %v500 = vrcp.pop %v499
      %v501 = vmul.f32 %v496, %v500
      %v502 = vpack.c.bf16 %v501, %v501
      %503 = vrot.lane.b32.xlu0 %v438, 56
      %v504 = vpop.permute.xlu0 %503
      %v506 = vsel %vm326, %v502, 0
      %v509 = vsel %vm391, %v504, 0
      %511 = vmatprep.subr.bf16.mxu0 0
      %512 = vmatpush1.bf16.msra.mxu0 %v509
      %513 = vmatprep.subr.bf16.mxu0 0
      %514 = vmatpush1.bf16.msra.mxu0 0
      %515 = vmatprep.subr.bf16.mxu0 0
      %516 = vmatpush1.bf16.msra.mxu0 0
      %517 = vmatprep.subr.bf16.mxu0 0
      %518 = vmatpush1.bf16.msra.mxu0 0
      %519 = vmatprep.subr.bf16.mxu0 0
      %520 = vmatpush1.bf16.msra.mxu0 0
      %521 = vmatprep.subr.bf16.mxu0 0
      %522 = vmatpush1.bf16.msra.mxu0 0
      %523 = vmatprep.subr.bf16.mxu0 0
      %524 = vmatpush1.bf16.msra.mxu0 0
      %525 = vmatprep.subr.bf16.mxu0 0
      %526 = vmatpush1.bf16.msra.mxu0 0
      %527 = vmatprep.subr.bf16.mxu0 0
      %528 = vmatpush1.bf16.msra.mxu0 0
      %529 = vmatprep.subr.bf16.mxu0 0
      %530 = vmatpush1.bf16.msra.mxu0 0
      %531 = vmatprep.subr.bf16.mxu0 0
      %532 = vmatpush1.bf16.msra.mxu0 0
      %533 = vmatprep.subr.bf16.mxu0 0
      %534 = vmatpush1.bf16.msra.mxu0 0
      %535 = vmatprep.subr.bf16.mxu0 0
      %536 = vmatpush1.bf16.msra.mxu0 0
      %537 = vmatprep.subr.bf16.mxu0 0
      %538 = vmatpush1.bf16.msra.mxu0 0
      %539 = vmatprep.subr.bf16.mxu0 0
      %540 = vmatpush1.bf16.msra.mxu0 0
      %541 = vmatprep.subr.bf16.mxu0 0
      %542 = vmatpush1.bf16.msra.mxu0 0
      %543 = vmatprep.mubr.bf16.mxu0 0
      %544 = vmatmul.mubr.bf16.gmra.mrb[0].mxu0 %v506
      %v545 = vpop.f32.mrb[0].mxu0
      %v546 = vadd.f32 0.0, %v545
      %v547 = vpop.f32.mrb[0].mxu0
      %v548 = vpop.f32.mrb[0].mxu0
      %v549 = vpop.f32.mrb[0].mxu0
      %550 = vdwg.mxu0
      %552 = vrot.lane.b32.xlu0 %v546, 8
      %v553 = vpop.permute.xlu0 %552
      %vm555 = vcmask 130112
      %556 = vst.msk [vmem:[%s435] sm:$0xff] %vm555, %v553
      %v557 = vld [vmem:[%s320] sm:$0xff]
      %v558 = vpack.c.bf16 %v557, %v557
      %560 = vrot.lane.b32.xlu0 %v558, 112
      %v561 = vpop.permute.xlu0 %560
      %562 = vrot.lane.b32.xlu0 %v558, 80
      %v563 = vpop.permute.xlu0 %562
      %v565 = vsel %vm326, %v561, 0
      %v568 = vsel %vm326, %v563, 0
      %570 = vmatprep.subr.bf16.mxu0 0
      %571 = vmatpush1.bf16.xpose.msra.mxu0 %v568
      %572 = vmatprep.subr.bf16.mxu0 0
      %573 = vmatpush1.bf16.xpose.msra.mxu0 0
      %574 = vmatprep.subr.bf16.mxu0 0
      %575 = vmatpush1.bf16.xpose.msra.mxu0 0
      %576 = vmatprep.subr.bf16.mxu0 0
      %577 = vmatpush1.bf16.xpose.msra.mxu0 0
      %578 = vmatprep.subr.bf16.mxu0 0
      %579 = vmatpush1.bf16.xpose.msra.mxu0 0
      %580 = vmatprep.subr.bf16.mxu0 0
      %581 = vmatpush1.bf16.xpose.msra.mxu0 0
      %582 = vmatprep.subr.bf16.mxu0 0
      %583 = vmatpush1.bf16.xpose.msra.mxu0 0
      %584 = vmatprep.subr.bf16.mxu0 0
      %585 = vmatpush1.bf16.xpose.msra.mxu0 0
      %586 = vmatprep.subr.bf16.mxu0 0
      %587 = vmatpush1.bf16.xpose.msra.mxu0 0
      %588 = vmatprep.subr.bf16.mxu0 0
      %589 = vmatpush1.bf16.xpose.msra.mxu0 0
      %590 = vmatprep.subr.bf16.mxu0 0
      %591 = vmatpush1.bf16.xpose.msra.mxu0 0
      %592 = vmatprep.subr.bf16.mxu0 0
      %593 = vmatpush1.bf16.xpose.msra.mxu0 0
      %594 = vmatprep.subr.bf16.mxu0 0
      %595 = vmatpush1.bf16.xpose.msra.mxu0 0
      %596 = vmatprep.subr.bf16.mxu0 0
      %597 = vmatpush1.bf16.xpose.msra.mxu0 0
      %598 = vmatprep.subr.bf16.mxu0 0
      %599 = vmatpush1.bf16.xpose.msra.mxu0 0
      %600 = vmatprep.subr.bf16.mxu0 0
      %601 = vmatpush1.bf16.xpose.msra.mxu0 0
      %602 = vmatprep.mubr.bf16.mxu0 0
      %603 = vmatmul.mubr.bf16.gmra.mrb[0].mxu0 %v565
      %v604 = vpop.f32.mrb[0].mxu0
      %v605 = vadd.f32 0.0, %v604
      %v606 = vpop.f32.mrb[0].mxu0
      %v607 = vpop.f32.mrb[0].mxu0
      %v608 = vpop.f32.mrb[0].mxu0
      %609 = vdwg.mxu0
      %v610 = vmul.f32 %v605, 0.35355338
      %v611 = vsel %vm326, %v610, -inf
      %612 = vmax.xlane.f32.xlu0 %v611
      %v613 = vpop.xlane.xlu0 %612
      %v614 = vsub.f32 %v610, %v613
      %v615 = vmul.f32 %v614, 1.442695
      %v616 = vpow.pop %v615
      %v617 = vsel %vm326, %v616, 0.0
      %618 = vadd.xlane.f32.xlu0 %v617
      %v619 = vpop.xlane.xlu0 %618
      %v620 = vrcp.pop %v619
      %v621 = vmul.f32 %v616, %v620
      %v622 = vpack.c.bf16 %v621, %v621
      %623 = vrot.lane.b32.xlu0 %v558, 48
      %v624 = vpop.permute.xlu0 %623
      %v626 = vsel %vm326, %v622, 0
      %v629 = vsel %vm391, %v624, 0
      %631 = vmatprep.subr.bf16.mxu0 0
      %632 = vmatpush1.bf16.msra.mxu0 %v629
      %633 = vmatprep.subr.bf16.mxu0 0
      %634 = vmatpush1.bf16.msra.mxu0 0
      %635 = vmatprep.subr.bf16.mxu0 0
      %636 = vmatpush1.bf16.msra.mxu0 0
      %637 = vmatprep.subr.bf16.mxu0 0
      %638 = vmatpush1.bf16.msra.mxu0 0
      %639 = vmatprep.subr.bf16.mxu0 0
      %640 = vmatpush1.bf16.msra.mxu0 0
      %641 = vmatprep.subr.bf16.mxu0 0
      %642 = vmatpush1.bf16.msra.mxu0 0
      %643 = vmatprep.subr.bf16.mxu0 0
      %644 = vmatpush1.bf16.msra.mxu0 0
      %645 = vmatprep.subr.bf16.mxu0 0
      %646 = vmatpush1.bf16.msra.mxu0 0
      %647 = vmatprep.subr.bf16.mxu0 0
      %648 = vmatpush1.bf16.msra.mxu0 0
      %649 = vmatprep.subr.bf16.mxu0 0
      %650 = vmatpush1.bf16.msra.mxu0 0
      %651 = vmatprep.subr.bf16.mxu0 0
      %652 = vmatpush1.bf16.msra.mxu0 0
      %653 = vmatprep.subr.bf16.mxu0 0
      %654 = vmatpush1.bf16.msra.mxu0 0
      %655 = vmatprep.subr.bf16.mxu0 0
      %656 = vmatpush1.bf16.msra.mxu0 0
      %657 = vmatprep.subr.bf16.mxu0 0
      %658 = vmatpush1.bf16.msra.mxu0 0
      %659 = vmatprep.subr.bf16.mxu0 0
      %660 = vmatpush1.bf16.msra.mxu0 0
      %661 = vmatprep.subr.bf16.mxu0 0
      %662 = vmatpush1.bf16.msra.mxu0 0
      %663 = vmatprep.mubr.bf16.mxu0 0
      %664 = vmatmul.mubr.bf16.gmra.mrb[0].mxu0 %v626
      %v665 = vpop.f32.mrb[0].mxu0
      %v666 = vadd.f32 0.0, %v665
      %v667 = vpop.f32.mrb[0].mxu0
      %v668 = vpop.f32.mrb[0].mxu0
      %v669 = vpop.f32.mrb[0].mxu0
      %670 = vdwg.mxu0
      %672 = vrot.lane.b32.xlu0 %v666, 16
      %v673 = vpop.permute.xlu0 %672
      %vm675 = vcmask 195712
      %676 = vst.msk [vmem:[%s435] sm:$0xff] %vm675, %v673
      %v677 = vld [vmem:[%s320] sm:$0xff]
      %v678 = vpack.c.bf16 %v677, %v677
      %680 = vrot.lane.b32.xlu0 %v678, 104
      %v681 = vpop.permute.xlu0 %680
      %682 = vrot.lane.b32.xlu0 %v678, 72
      %v683 = vpop.permute.xlu0 %682
      %v685 = vsel %vm326, %v681, 0
      %v688 = vsel %vm326, %v683, 0
      %690 = vmatprep.subr.bf16.mxu0 0
      %691 = vmatpush1.bf16.xpose.msra.mxu0 %v688
      %692 = vmatprep.subr.bf16.mxu0 0
      %693 = vmatpush1.bf16.xpose.msra.mxu0 0
      %694 = vmatprep.subr.bf16.mxu0 0
      %695 = vmatpush1.bf16.xpose.msra.mxu0 0
      %696 = vmatprep.subr.bf16.mxu0 0
      %697 = vmatpush1.bf16.xpose.msra.mxu0 0
      %698 = vmatprep.subr.bf16.mxu0 0
      %699 = vmatpush1.bf16.xpose.msra.mxu0 0
      %700 = vmatprep.subr.bf16.mxu0 0
      %701 = vmatpush1.bf16.xpose.msra.mxu0 0
      %702 = vmatprep.subr.bf16.mxu0 0
      %703 = vmatpush1.bf16.xpose.msra.mxu0 0
      %704 = vmatprep.subr.bf16.mxu0 0
      %705 = vmatpush1.bf16.xpose.msra.mxu0 0
      %706 = vmatprep.subr.bf16.mxu0 0
      %707 = vmatpush1.bf16.xpose.msra.mxu0 0
      %708 = vmatprep.subr.bf16.mxu0 0
      %709 = vmatpush1.bf16.xpose.msra.mxu0 0
      %710 = vmatprep.subr.bf16.mxu0 0
      %711 = vmatpush1.bf16.xpose.msra.mxu0 0
      %712 = vmatprep.subr.bf16.mxu0 0
      %713 = vmatpush1.bf16.xpose.msra.mxu0 0
      %714 = vmatprep.subr.bf16.mxu0 0
      %715 = vmatpush1.bf16.xpose.msra.mxu0 0
      %716 = vmatprep.subr.bf16.mxu0 0
      %717 = vmatpush1.bf16.xpose.msra.mxu0 0
      %718 = vmatprep.subr.bf16.mxu0 0
      %719 = vmatpush1.bf16.xpose.msra.mxu0 0
      %720 = vmatprep.subr.bf16.mxu0 0
      %721 = vmatpush1.bf16.xpose.msra.mxu0 0
      %722 = vmatprep.mubr.bf16.mxu0 0
      %723 = vmatmul.mubr.bf16.gmra.mrb[0].mxu0 %v685
      %v724 = vpop.f32.mrb[0].mxu0
      %v725 = vadd.f32 0.0, %v724
      %v726 = vpop.f32.mrb[0].mxu0
      %v727 = vpop.f32.mrb[0].mxu0
      %v728 = vpop.f32.mrb[0].mxu0
      %729 = vdwg.mxu0
      %v730 = vmul.f32 %v725, 0.35355338
      %v731 = vsel %vm326, %v730, -inf
      %732 = vmax.xlane.f32.xlu0 %v731
      %v733 = vpop.xlane.xlu0 %732
      %v734 = vsub.f32 %v730, %v733
      %v735 = vmul.f32 %v734, 1.442695
      %v736 = vpow.pop %v735
      %v737 = vsel %vm326, %v736, 0.0
      %738 = vadd.xlane.f32.xlu0 %v737
      %v739 = vpop.xlane.xlu0 %738
      %v740 = vrcp.pop %v739
      %v741 = vmul.f32 %v736, %v740
      %v742 = vpack.c.bf16 %v741, %v741
      %743 = vrot.lane.b32.xlu0 %v678, 40
      %v744 = vpop.permute.xlu0 %743
      %v746 = vsel %vm326, %v742, 0
      %v749 = vsel %vm391, %v744, 0
      %751 = vmatprep.subr.bf16.mxu0 0
      %752 = vmatpush1.bf16.msra.mxu0 %v749
      %753 = vmatprep.subr.bf16.mxu0 0
      %754 = vmatpush1.bf16.msra.mxu0 0
      %755 = vmatprep.subr.bf16.mxu0 0
      %756 = vmatpush1.bf16.msra.mxu0 0
      %757 = vmatprep.subr.bf16.mxu0 0
      %758 = vmatpush1.bf16.msra.mxu0 0
      %759 = vmatprep.subr.bf16.mxu0 0
      %760 = vmatpush1.bf16.msra.mxu0 0
      %761 = vmatprep.subr.bf16.mxu0 0
      %762 = vmatpush1.bf16.msra.mxu0 0
      %763 = vmatprep.subr.bf16.mxu0 0
      %764 = vmatpush1.bf16.msra.mxu0 0
      %765 = vmatprep.subr.bf16.mxu0 0
      %766 = vmatpush1.bf16.msra.mxu0 0
      %767 = vmatprep.subr.bf16.mxu0 0
      %768 = vmatpush1.bf16.msra.mxu0 0
      %769 = vmatprep.subr.bf16.mxu0 0
      %770 = vmatpush1.bf16.msra.mxu0 0
      %771 = vmatprep.subr.bf16.mxu0 0
      %772 = vmatpush1.bf16.msra.mxu0 0
      %773 = vmatprep.subr.bf16.mxu0 0
      %774 = vmatpush1.bf16.msra.mxu0 0
      %775 = vmatprep.subr.bf16.mxu0 0
      %776 = vmatpush1.bf16.msra.mxu0 0
      %777 = vmatprep.subr.bf16.mxu0 0
      %778 = vmatpush1.bf16.msra.mxu0 0
      %779 = vmatprep.subr.bf16.mxu0 0
      %780 = vmatpush1.bf16.msra.mxu0 0
      %781 = vmatprep.subr.bf16.mxu0 0
      %782 = vmatpush1.bf16.msra.mxu0 0
      %783 = vmatprep.mubr.bf16.mxu0 0
      %784 = vmatmul.mubr.bf16.gmra.mrb[0].mxu0 %v746
      %v785 = vpop.f32.mrb[0].mxu0
      %v786 = vadd.f32 0.0, %v785
      %v787 = vpop.f32.mrb[0].mxu0
      %v788 = vpop.f32.mrb[0].mxu0
      %v789 = vpop.f32.mrb[0].mxu0
      %790 = vdwg.mxu0
      %792 = vrot.lane.b32.xlu0 %v786, 24
      %v793 = vpop.permute.xlu0 %792
      %vm795 = vcmask 261312
      %796 = vst.msk [vmem:[%s435] sm:$0xff] %vm795, %v793
    $region126: #{tpu_custom_call.1} parent=1 // loop_footer
      %s318 = sadd.s32 1, %s314
    $region127: #{tpu_custom_call.1} parent=1 // loop_footer_branch
      %313 = sbr.rel target = $region123
    $region128: #{tpu_custom_call.1} parent=1 // loop_exit
      _
    %v797 = vld [vmem:[#allocation3] sm:$0xff]
    %v798 = vld [vmem:[#allocation3 + $0x8] sm:$0xff]
    %v799 = vpack.c.bf16 %v798, %v797
    %v800 = vld [vmem:[#allocation13] sm:$0xf]
    %v801 = vld [vmem:[#allocation13 + $0x4] sm:$0xf]
    %v802 = vld [vmem:[#allocation13 + $0x8] sm:$0xf]
    %v803 = vld [vmem:[#allocation13 + $0xc] sm:$0xf]
    %v804 = vld [vmem:[#allocation15] sm:$0x1]
    %v806 = vlaneseq
    %v807 = vshrl.u32 %v806, 7
    %v808 = vsub.s32 0, %v807
    %v809 = vrot.slane %v804, %v808
    %v815 = vunpack.c.l.b16 %v800
    %v816 = vunpack.c.l.b16 %v801
    %v817 = vunpack.c.l.b16 %v802
    %v818 = vunpack.c.l.b16 %v803
    %v819 = vpack.c.b16 %v816, %v815
    %v820 = vpack.c.b16 %v818, %v817
    %v824 = vsel %vm265, %v799, 0
    %826 = vmatprep.subr.bf16.mxu0 0
    %827 = vmatpush1.bf16.msra.mxu0 %v819
    %828 = vmatprep.subr.bf16.mxu0 0
    %829 = vmatpush1.bf16.msra.mxu0 %v820
    %830 = vmatprep.subr.bf16.mxu0 0
    %831 = vmatpush1.bf16.msra.mxu0 0
    %832 = vmatprep.subr.bf16.mxu0 0
    %833 = vmatpush1.bf16.msra.mxu0 0
    %834 = vmatprep.subr.bf16.mxu0 0
    %835 = vmatpush1.bf16.msra.mxu0 0
    %836 = vmatprep.subr.bf16.mxu0 0
    %837 = vmatpush1.bf16.msra.mxu0 0
    %838 = vmatprep.subr.bf16.mxu0 0
    %839 = vmatpush1.bf16.msra.mxu0 0
    %840 = vmatprep.subr.bf16.mxu0 0
    %841 = vmatpush1.bf16.msra.mxu0 0
    %842 = vmatprep.subr.bf16.mxu0 0
    %843 = vmatpush1.bf16.msra.mxu0 0
    %844 = vmatprep.subr.bf16.mxu0 0
    %845 = vmatpush1.bf16.msra.mxu0 0
    %846 = vmatprep.subr.bf16.mxu0 0
    %847 = vmatpush1.bf16.msra.mxu0 0
    %848 = vmatprep.subr.bf16.mxu0 0
    %849 = vmatpush1.bf16.msra.mxu0 0
    %850 = vmatprep.subr.bf16.mxu0 0
    %851 = vmatpush1.bf16.msra.mxu0 0
    %852 = vmatprep.subr.bf16.mxu0 0
    %853 = vmatpush1.bf16.msra.mxu0 0
    %854 = vmatprep.subr.bf16.mxu0 0
    %855 = vmatpush1.bf16.msra.mxu0 0
    %856 = vmatprep.subr.bf16.mxu0 0
    %857 = vmatpush1.bf16.msra.mxu0 0
    %858 = vmatprep.mubr.bf16.mxu0 0
    %859 = vmatmul.mubr.bf16.gmra.mrb[0].mxu0 %v824
    %v860 = vpop.f32.mrb[0].mxu0
    %v861 = vadd.f32 %v809, %v860
    %v862 = vpop.f32.mrb[0].mxu0
    %v863 = vpop.f32.mrb[0].mxu0
    %v864 = vadd.f32 %v809, %v863
    %v865 = vpop.f32.mrb[0].mxu0
    %866 = vdwg.mxu0
    %v867 = vld [vmem:[#allocation7] sm:$0x1]
    %v868 = vld [vmem:[#allocation7 + $0x1] sm:$0x1]
    %v871 = vlaneseq
    %v872 = vshrl.u32 %v871, 7
    %v873 = vsub.s32 0, %v872
    %v874 = vrot.slane %v867, %v873
    %v875 = vlaneseq
    %v876 = vshrl.u32 %v875, 7
    %v877 = vsub.s32 0, %v876
    %v878 = vrot.slane %v868, %v877
    %v881 = vld [vmem:[#allocation9] sm:$0x1]
    %v882 = vld [vmem:[#allocation9 + $0x1] sm:$0x1]
    %v885 = vlaneseq
    %v886 = vshrl.u32 %v885, 7
    %v887 = vsub.s32 0, %v886
    %v888 = vrot.slane %v881, %v887
    %v889 = vlaneseq
    %v890 = vshrl.u32 %v889, 7
    %v891 = vsub.s32 0, %v890
    %v892 = vrot.slane %v882, %v891
    %v895 = vadd.f32 %v239, %v861
    %v896 = vadd.f32 %v240, %v864
    %v897 = vld [vmem:[#allocation22] sm:$0x1]
    %v898 = vld [vmem:[#allocation24] sm:$0x1]
    %v899 = vsel %vm265, %v895, 0.0
    %900 = vadd.xlane.f32.xlu0 %v899
    %v901 = vpop.xlane.xlu0 %900
    %v902 = vsel %vm265, %v896, 0.0
    %903 = vadd.xlane.f32.xlu0 %v902
    %v904 = vpop.xlane.xlu0 %903
    %v905 = vrcp.pop 32.0
    %v906 = vmul.f32 %v901, %v905
    %v907 = vmul.f32 %v904, %v905
    %v908 = vsub.f32 %v895, %v906
    %v909 = vsub.f32 %v896, %v907
    %v910 = vmul.f32 %v908, %v908
    %v911 = vmul.f32 %v909, %v909
    %v912 = vsel %vm265, %v910, 0.0
    %913 = vadd.xlane.f32.xlu0 %v912
    %v914 = vpop.xlane.xlu0 %913
    %v915 = vsel %vm265, %v911, 0.0
    %916 = vadd.xlane.f32.xlu0 %v915
    %v917 = vpop.xlane.xlu0 %916
    %v918 = vmul.f32 %v914, %v905
    %v919 = vmul.f32 %v917, %v905
    %v920 = vadd.f32 %v918, 1e-05
    %v921 = vadd.f32 %v919, 1e-05
    %v922 = vrsqrt.pop %v920
    %v923 = vrsqrt.pop %v921
    %v924 = vmul.f32 %v908, %v922
    %v925 = vmul.f32 %v909, %v923
    %v927 = vlaneseq
    %v928 = vshrl.u32 %v927, 7
    %v929 = vsub.s32 0, %v928
    %v930 = vrot.slane %v897, %v929
    %v932 = vmul.f32 %v924, %v930
    %v933 = vmul.f32 %v925, %v930
    %v935 = vlaneseq
    %v936 = vshrl.u32 %v935, 7
    %v937 = vsub.s32 0, %v936
    %v938 = vrot.slane %v898, %v937
    %v940 = vadd.f32 %v932, %v938
    %v941 = vadd.f32 %v933, %v938
    %v942 = vmul.f32 %v874, %v940
    %v943 = vmul.f32 %v878, %v941
    %v944 = vadd.f32 %v942, %v888
    %v945 = vadd.f32 %v943, %v892
    %v946 = vpack.c.bf16 %v945, %v944
    %v947 = vld [vmem:[#allocation16] sm:$0xf]
    %v948 = vld [vmem:[#allocation16 + $0x4] sm:$0xf]
    %v949 = vld [vmem:[#allocation16 + $0x8] sm:$0xf]
    %v950 = vld [vmem:[#allocation16 + $0xc] sm:$0xf]
    %v951 = vld [vmem:[#allocation18] sm:$0x1]
    %v953 = vlaneseq
    %v954 = vshrl.u32 %v953, 7
    %v955 = vsub.s32 0, %v954
    %v956 = vrot.slane %v951, %v955
    %v962 = vunpack.c.l.b16 %v947
    %v963 = vunpack.c.l.b16 %v948
    %v964 = vunpack.c.l.b16 %v949
    %v965 = vunpack.c.l.b16 %v950
    %v966 = vpack.c.b16 %v963, %v962
    %v967 = vpack.c.b16 %v965, %v964
    %v971 = vsel %vm265, %v946, 0
    %973 = vmatprep.subr.bf16.mxu0 0
    %974 = vmatpush1.bf16.msra.mxu0 %v966
    %975 = vmatprep.subr.bf16.mxu0 0
    %976 = vmatpush1.bf16.msra.mxu0 %v967
    %977 = vmatprep.subr.bf16.mxu0 0
    %978 = vmatpush1.bf16.msra.mxu0 0
    %979 = vmatprep.subr.bf16.mxu0 0
    %980 = vmatpush1.bf16.msra.mxu0 0
    %981 = vmatprep.subr.bf16.mxu0 0
    %982 = vmatpush1.bf16.msra.mxu0 0
    %983 = vmatprep.subr.bf16.mxu0 0
    %984 = vmatpush1.bf16.msra.mxu0 0
    %985 = vmatprep.subr.bf16.mxu0 0
    %986 = vmatpush1.bf16.msra.mxu0 0
    %987 = vmatprep.subr.bf16.mxu0 0
    %988 = vmatpush1.bf16.msra.mxu0 0
    %989 = vmatprep.subr.bf16.mxu0 0
    %990 = vmatpush1.bf16.msra.mxu0 0
    %991 = vmatprep.subr.bf16.mxu0 0
    %992 = vmatpush1.bf16.msra.mxu0 0
    %993 = vmatprep.subr.bf16.mxu0 0
    %994 = vmatpush1.bf16.msra.mxu0 0
    %995 = vmatprep.subr.bf16.mxu0 0
    %996 = vmatpush1.bf16.msra.mxu0 0
    %997 = vmatprep.subr.bf16.mxu0 0
    %998 = vmatpush1.bf16.msra.mxu0 0
    %999 = vmatprep.subr.bf16.mxu0 0
    %1000 = vmatpush1.bf16.msra.mxu0 0
    %1001 = vmatprep.subr.bf16.mxu0 0
    %1002 = vmatpush1.bf16.msra.mxu0 0
    %1003 = vmatprep.subr.bf16.mxu0 0
    %1004 = vmatpush1.bf16.msra.mxu0 0
    %1005 = vmatprep.mubr.bf16.mxu0 0
    %1006 = vmatmul.mubr.bf16.gmra.mrb[0].mxu0 %v971
    %v1007 = vpop.f32.mrb[0].mxu0
    %v1008 = vadd.f32 %v956, %v1007
    %v1009 = vpop.f32.mrb[0].mxu0
    %v1010 = vpop.f32.mrb[0].mxu0
    %v1011 = vadd.f32 %v956, %v1010
    %v1012 = vpop.f32.mrb[0].mxu0
    %1013 = vdwg.mxu0
    %v1014 = vmax.f32 %v1008, 0.0
    %v1015 = vmax.f32 %v1011, 0.0
    %v1016 = vpack.c.bf16 %v1015, %v1014
    %v1017 = vld [vmem:[#allocation19] sm:$0xf]
    %v1018 = vld [vmem:[#allocation19 + $0x4] sm:$0xf]
    %v1019 = vld [vmem:[#allocation19 + $0x8] sm:$0xf]
    %v1020 = vld [vmem:[#allocation19 + $0xc] sm:$0xf]
    %v1021 = vld [vmem:[#allocation19 + $0x10] sm:$0xf]
    %v1022 = vld [vmem:[#allocation19 + $0x14] sm:$0xf]
    %v1023 = vld [vmem:[#allocation19 + $0x18] sm:$0xf]
    %v1024 = vld [vmem:[#allocation19 + $0x1c] sm:$0xf]
    %v1025 = vld [vmem:[#allocation21] sm:$0x1]
    %v1027 = vlaneseq
    %v1028 = vshrl.u32 %v1027, 7
    %v1029 = vsub.s32 0, %v1028
    %v1030 = vrot.slane %v1025, %v1029
    %v1040 = vunpack.c.l.b16 %v1017
    %v1041 = vunpack.c.l.b16 %v1018
    %v1042 = vunpack.c.l.b16 %v1019
    %v1043 = vunpack.c.l.b16 %v1020
    %v1044 = vunpack.c.l.b16 %v1021
    %v1045 = vunpack.c.l.b16 %v1022
    %v1046 = vunpack.c.l.b16 %v1023
    %v1047 = vunpack.c.l.b16 %v1024
    %v1048 = vpack.c.b16 %v1041, %v1040
    %v1049 = vpack.c.b16 %v1043, %v1042
    %v1050 = vpack.c.b16 %v1045, %v1044
    %v1051 = vpack.c.b16 %v1047, %v1046
    %vm1056 = vcmask 523264
    %v1058 = vsel %vm1056, %v1016, 0
    %1060 = vmatprep.subr.bf16.mxu0 0
    %1061 = vmatpush1.bf16.msra.mxu0 %v1048
    %1062 = vmatprep.subr.bf16.mxu0 0
    %1063 = vmatpush1.bf16.msra.mxu0 %v1049
    %1064 = vmatprep.subr.bf16.mxu0 0
    %1065 = vmatpush1.bf16.msra.mxu0 %v1050
    %1066 = vmatprep.subr.bf16.mxu0 0
    %1067 = vmatpush1.bf16.msra.mxu0 %v1051
    %1068 = vmatprep.subr.bf16.mxu0 0
    %1069 = vmatpush1.bf16.msra.mxu0 0
    %1070 = vmatprep.subr.bf16.mxu0 0
    %1071 = vmatpush1.bf16.msra.mxu0 0
    %1072 = vmatprep.subr.bf16.mxu0 0
    %1073 = vmatpush1.bf16.msra.mxu0 0
    %1074 = vmatprep.subr.bf16.mxu0 0
    %1075 = vmatpush1.bf16.msra.mxu0 0
    %1076 = vmatprep.subr.bf16.mxu0 0
    %1077 = vmatpush1.bf16.msra.mxu0 0
    %1078 = vmatprep.subr.bf16.mxu0 0
    %1079 = vmatpush1.bf16.msra.mxu0 0
    %1080 = vmatprep.subr.bf16.mxu0 0
    %1081 = vmatpush1.bf16.msra.mxu0 0
    %1082 = vmatprep.subr.bf16.mxu0 0
    %1083 = vmatpush1.bf16.msra.mxu0 0
    %1084 = vmatprep.subr.bf16.mxu0 0
    %1085 = vmatpush1.bf16.msra.mxu0 0
    %1086 = vmatprep.subr.bf16.mxu0 0
    %1087 = vmatpush1.bf16.msra.mxu0 0
    %1088 = vmatprep.subr.bf16.mxu0 0
    %1089 = vmatpush1.bf16.msra.mxu0 0
    %1090 = vmatprep.subr.bf16.mxu0 0
    %1091 = vmatpush1.bf16.msra.mxu0 0
    %1092 = vmatprep.mubr.bf16.mxu0 0
    %1093 = vmatmul.mubr.bf16.gmra.mrb[0].mxu0 %v1058
    %v1094 = vpop.f32.mrb[0].mxu0
    %v1095 = vadd.f32 %v1030, %v1094
    %v1096 = vpop.f32.mrb[0].mxu0
    %v1097 = vpop.f32.mrb[0].mxu0
    %v1098 = vadd.f32 %v1030, %v1097
    %v1099 = vpop.f32.mrb[0].mxu0
    %1100 = vdwg.mxu0
    %v1101 = vadd.f32 %v944, %v1095
    %v1102 = vadd.f32 %v945, %v1098
    %v1103 = vld [vmem:[#allocation25] sm:$0x1]
    %v1104 = vld [vmem:[#allocation27] sm:$0x1]
    %v1105 = vsel %vm265, %v1101, 0.0
    %1106 = vadd.xlane.f32.xlu0 %v1105
    %v1107 = vpop.xlane.xlu0 %1106
    %v1108 = vsel %vm265, %v1102, 0.0
    %1109 = vadd.xlane.f32.xlu0 %v1108
    %v1110 = vpop.xlane.xlu0 %1109
    %v1111 = vmul.f32 %v1107, %v905
    %v1112 = vmul.f32 %v1110, %v905
    %v1113 = vsub.f32 %v1101, %v1111
    %v1114 = vsub.f32 %v1102, %v1112
    %v1115 = vmul.f32 %v1113, %v1113
    %v1116 = vmul.f32 %v1114, %v1114
    %v1117 = vsel %vm265, %v1115, 0.0
    %1118 = vadd.xlane.f32.xlu0 %v1117
    %v1119 = vpop.xlane.xlu0 %1118
    %v1120 = vsel %vm265, %v1116, 0.0
    %1121 = vadd.xlane.f32.xlu0 %v1120
    %v1122 = vpop.xlane.xlu0 %1121
    %v1123 = vmul.f32 %v1119, %v905
    %v1124 = vmul.f32 %v1122, %v905
    %v1125 = vadd.f32 %v1123, 1e-05
    %v1126 = vadd.f32 %v1124, 1e-05
    %v1127 = vrsqrt.pop %v1125
    %v1128 = vrsqrt.pop %v1126
    %v1129 = vmul.f32 %v1113, %v1127
    %v1130 = vmul.f32 %v1114, %v1128
    %v1132 = vlaneseq
    %v1133 = vshrl.u32 %v1132, 7
    %v1134 = vsub.s32 0, %v1133
    %v1135 = vrot.slane %v1103, %v1134
    %v1137 = vmul.f32 %v1129, %v1135
    %v1138 = vmul.f32 %v1130, %v1135
    %v1140 = vlaneseq
    %v1141 = vshrl.u32 %v1140, 7
    %v1142 = vsub.s32 0, %v1141
    %v1143 = vrot.slane %v1104, %v1142
    %v1145 = vadd.f32 %v1137, %v1143
    %v1146 = vadd.f32 %v1138, %v1143
    %v1147 = vmul.f32 %v874, %v1145
    %v1148 = vmul.f32 %v878, %v1146
    %v1149 = vadd.f32 %v1147, %v888
    %v1150 = vadd.f32 %v1148, %v892
    %1151 = vst.msk [vmem:[#allocation28] sm:$0xff] %vm265, %v1149
    %1152 = vst.msk [vmem:[#allocation28 + $0x8] sm:$0xff] %vm265, %v1150
    // Predicated region
    $region129: #{tpu_custom_call.1} parent=1 // pred_check
      _
    $region130: #{tpu_custom_call.1} parent=1 // pred_check_branch
      %1154 = sbr.rel (0) target = $region132
    $region131: #{tpu_custom_call.1} parent=1 // pred_region
      %s1156 = ssub.s32 256, 256
      %1157 = vsyncadd [#allocation6], %s1156
      %s1158 = sshll.u32 [#allocation28], 4
      %s1159 = int_to_ptr.vmem [resolvable:$true] %s1158
      %1164 = dma.vmem_to_hbm [thread:$0]  %s1159, 256, %s15, [#allocation6], 128, 128, 8
    $region132: #{tpu_custom_call.1} parent=1 // pred_fallthru
      _
    // Predicated region
    $region133: #{tpu_custom_call.1} parent=1 // pred_check
      _
    $region134: #{tpu_custom_call.1} parent=1 // pred_check_branch
      %1166 = sbr.rel (0) target = $region136
    $region135: #{tpu_custom_call.1} parent=1 // pred_region
      %1167 = dma.done [#allocation6], 256
    $region136: #{tpu_custom_call.1} parent=1 // pred_fallthru
      _
    %1168 = vsyncpa [#allocation5], 1
    %1169 = vsyncpa [#allocation8], 1
    %1170 = vsyncpa [#allocation11], 1
    %1171 = vsyncpa [#allocation14], 1
    %1172 = vsyncpa [#allocation17], 1
    %1173 = vsyncpa [#allocation20], 1
    %1174 = vsyncpa [#allocation23], 1
    %1175 = vsyncpa [#allocation26], 1
    %1176 = vsyncpa [#allocation6], 1

</llo_original>
